<compile_context>
chip_gen: v5e
topology: v5e:2x2
jax: 0.10.0
libtpu: 0.0.40
codegen_flags: <defaults>
</compile_context>

<pallas_src>
import jax
import jax.numpy as jnp
from jax.experimental import pallas as pl
from jax.experimental.pallas import tpu as pltpu


# ----------------------------------------------------------------------------- constants

NUM_CHANNELS = 32          # backbone feature width (hard-coded 32 in the module)
DEC_HIDDEN = 256           # decoder hidden size (alignment_proj input is 256)
ALIGN_OUT = 1024           # alignment_proj: Linear(256, 1024)
NUM_CLASSES = 10           # small synthetic class count (default 200 in module, configurable)
STUFF_CLASSES = (0, 1)
NUM_INST_CLASSES = NUM_CLASSES - len(STUFF_CLASSES)   # "thing" classes
CLS_PAD = 128              # cls head padded to a lane-dense 128-wide slab
SCORE_W = 8                # narrow score output column (was 128 f32 -> writeback waste)

AUX_W = 8                  # coord slab width: [xyz | 1 | 0 0 0 0]
PT_IN = 16                 # packed per-point input: [feat(6) pad(2) | xyz(3) 1 pad(4)]
SEG_W = NUM_CHANNELS + AUX_W          # 40: combined segment-sum RHS / accumulator width
ONES_COL = NUM_CHANNELS + 3           # ones column -> per-superpoint counts


def _round_up(x, m):
    return ((x + m - 1) // m) * m


def _resident(shape):
    return pl.BlockSpec(shape, lambda *_: (0,) * len(shape))


# ----------------------------------------------------------------------------- kernels

def point_scatter_kernel(ids_ref, pts_ref,
                         w_big_ref, bn_s_ref, bn_b_ref,
                         b_p1_ref, ln_g_ref, ln_b_ref, w_p2_ref, b_p2_ref,
                         out_ref):
    """Fused per-point projection + pos-encode + tiled superpoint mean.

    grid = (M tiles ["parallel"], point tiles ["arbitrary"]).
    Per point tile (TN rows):
      proj  = pts @ blockdiag(W_in, W_pos1)                (one K=16 matmul)
      x     = relu(bn(proj[:, :32]))                       (center tap of SubMConv3d)
      x_pos = pos_encode tail (LN -> ReLU -> Linear)
      rhs   = bf16([x + x_pos | xyz 1 pad])                (TN, 40)
      out  += bf16 onehot(ids) @ rhs                       (tile_m, 40) f32 accumulate
    Last point tile: divide by the counts column in place.
    """
    mi = pl.program_id(0)
    t = pl.program_id(1)

    @pl.when(t == 0)
    def _init():
        out_ref[...] = jnp.zeros_like(out_ref)

    pts = pts_ref[...]                                       # (TN, 16) f32

    # --- fused [feature projection | pos_encode first linear] via block-diag weight
    proj = jnp.dot(pts, w_big_ref[...], preferred_element_type=jnp.float32)    # (TN, 64)
    x = jnp.maximum(proj[:, :NUM_CHANNELS] * bn_s_ref[...] + bn_b_ref[...], 0.0)

    # --- pos_encode tail: (+bias) -> LayerNorm -> ReLU -> Linear(32->32)
    h = proj[:, NUM_CHANNELS:] + b_p1_ref[...]
    mu = jnp.mean(h, axis=-1, keepdims=True)
    var = jnp.mean((h - mu) ** 2, axis=-1, keepdims=True)
    h = (h - mu) * jax.lax.rsqrt(var + 1e-5)
    h = jnp.maximum(h * ln_g_ref[...] + ln_b_ref[...], 0.0)
    x_pos = jnp.dot(h, w_p2_ref[...], preferred_element_type=jnp.float32) + b_p2_ref[...]

    comb = x + x_pos                                         # (TN, 32) f32

    # single bf16 RHS slab: [comb | xyz 1 pad] -> one MXU pass, one accumulator
    rhs = jnp.concatenate([comb, pts[:, AUX_W:PT_IN]], axis=1).astype(jnp.bfloat16)  # (TN, 40)

    # --- tiled segment-sum via bf16 one-hot matmul (0/1 exact in bf16, f32 accumulation)
    tile_m = out_ref.shape[0]
    ids = ids_ref[...]                                       # (1, TN) int32, padded ids = -1
    seg = jax.lax.broadcasted_iota(jnp.int32, (tile_m, ids.shape[1]), 0) + mi * tile_m
    onehot = (seg == ids).astype(jnp.bfloat16)               # (tile_m, TN) built directly in bf16

    out_ref[...] += jnp.dot(onehot, rhs, preferred_element_type=jnp.float32)

    @pl.when(t == pl.num_programs(1) - 1)
    def _finalize():
        acc = out_ref[...]                                   # (tile_m, 40)
        counts = acc[:, ONES_COL:ONES_COL + 1]               # ones column -> segment counts
        out_ref[...] = acc * (1.0 / jnp.maximum(counts, 1.0))


def decoder_kernel(x_ref, wd1_ref, bd1_ref, wd2_ref, bd2_ref,
                   wcls_ref, bcls_ref, wal_ref, bal_ref,
                   h1_ref, al_ref, score_ref):
    """Fused decoder stand-in + cls head + score + alignment_proj for one row tile."""
    x = x_ref[...]                                           # (TM, 32) bf16

    h1 = jnp.dot(x, wd1_ref[...], preferred_element_type=jnp.float32) + bd1_ref[...]
    h1 = jnp.maximum(h1, 0.0)
    h1b = h1.astype(jnp.bfloat16)
    h1_ref[...] = h1b                                        # hidden_states[0] (bf16 writeback)

    h2 = jnp.dot(h1b, wd2_ref[...], preferred_element_type=jnp.float32) + bd2_ref[...]
    h2b = h2.astype(jnp.bfloat16)

    # alignment_proj: Linear(256, 1024), bf16 writeback (f32 accumulation)
    al = jnp.dot(h2b, wal_ref[...], preferred_element_type=jnp.float32) + bal_ref[...]
    al_ref[...] = al.astype(jnp.bfloat16)

    # cls head (lane-padded to 128) + fused max-class score:
    #   score = max_c softmax(logits)[:, :-1] = exp(max(things) - logsumexp(all_real))
    logits = jnp.dot(h2b, wcls_ref[...], preferred_element_type=jnp.float32) + bcls_ref[...]
    col = jax.lax.broadcasted_iota(jnp.int32, logits.shape, 1)
    neg = jnp.float32(-1e30)
    valid_all = col < (NUM_INST_CLASSES + 1)
    valid_things = col < NUM_INST_CLASSES
    lmax_all = jnp.max(jnp.where(valid_all, logits, neg), axis=-1, keepdims=True)
    e = jnp.where(valid_all, jnp.exp(logits - lmax_all), 0.0)
    lse = lmax_all + jnp.log(jnp.sum(e, axis=-1, keepdims=True))
    lmax_things = jnp.max(jnp.where(valid_things, logits, neg), axis=-1, keepdims=True)
    score = jnp.exp(lmax_things - lse)                       # (TM, 1) f32
    score_ref[...] = jnp.broadcast_to(score, score_ref.shape)   # narrow (TM, 8) store


# ----------------------------------------------------------------------------- params

def init_params(key):
    ks = jax.random.split(key, 16)
    nrm = lambda k, s, sc=0.05: (jax.random.normal(k, s) * sc).astype(jnp.float32)
    p = {}
    # SubMConv3d(6, 32) center tap + pos_encode Linear(3,32) fused into one
    # block-diagonal (16, 64) weight over the packed [feat|coord] input.
    w_in = nrm(ks[0], (6, NUM_CHANNELS))
    w_pos1 = nrm(ks[1], (3, NUM_CHANNELS))
    w_big = jnp.zeros((PT_IN, 2 * NUM_CHANNELS), jnp.float32)
    w_big = w_big.at[0:6, 0:NUM_CHANNELS].set(w_in)
    w_big = w_big.at[AUX_W:AUX_W + 3, NUM_CHANNELS:2 * NUM_CHANNELS].set(w_pos1)
    p["w_in_pos"] = w_big
    # output_layer: BatchNorm1d(32, eps=1e-4) in eval mode (running mean=0, var=1, affine=id).
    p["bn_scale"] = jnp.full((1, NUM_CHANNELS), 1.0 / jnp.sqrt(1.0 + 1e-4), jnp.float32)
    p["bn_shift"] = jnp.zeros((1, NUM_CHANNELS), jnp.float32)
    # pos_encode tail params.
    p["b_pos1"] = nrm(ks[2], (1, NUM_CHANNELS))
    p["ln_g"] = jnp.ones((1, NUM_CHANNELS), jnp.float32)
    p["ln_b"] = jnp.zeros((1, NUM_CHANNELS), jnp.float32)
    p["w_pos2"] = nrm(ks[3], (NUM_CHANNELS, NUM_CHANNELS))
    p["b_pos2"] = nrm(ks[4], (1, NUM_CHANNELS))
    # TODO(synk): self.decoder is built from an external config (build_model(decoder));
    # a minimal 2-layer linear decoder with matching interface/shapes stands in for it.
    p["w_d1"] = nrm(ks[5], (NUM_CHANNELS, DEC_HIDDEN)).astype(jnp.bfloat16)
    p["b_d1"] = nrm(ks[6], (1, DEC_HIDDEN))
    p["w_d2"] = nrm(ks[7], (DEC_HIDDEN, DEC_HIDDEN)).astype(jnp.bfloat16)
    p["b_d2"] = nrm(ks[8], (1, DEC_HIDDEN))
    # cls head padded to a 128-wide lane-dense slab (zero weights / zero bias in pad cols).
    w_cls = nrm(ks[9], (DEC_HIDDEN, NUM_INST_CLASSES + 1))
    b_cls = nrm(ks[10], (1, NUM_INST_CLASSES + 1))
    p["w_cls"] = jnp.pad(w_cls, ((0, 0), (0, CLS_PAD - (NUM_INST_CLASSES + 1)))).astype(jnp.bfloat16)
    p["b_cls"] = jnp.pad(b_cls, ((0, 0), (0, CLS_PAD - (NUM_INST_CLASSES + 1))))
    # alignment_proj: Linear(256, 1024)
    p["w_al"] = nrm(ks[11], (DEC_HIDDEN, ALIGN_OUT)).astype(jnp.bfloat16)
    p["b_al"] = nrm(ks[12], (1, ALIGN_OUT))
    return p


# ----------------------------------------------------------------------------- pallas wrappers

def run_point_scatter(params, feats2, coord, gids, m_total,
                      tile_n_max=1024, tile_m_max=512,
                      vmem_limit=32 * 1024 * 1024):
    """Fused per-point pipeline + superpoint scatter-mean (one gridded call, M x N tiled)."""
    n_total = feats2.shape[0]

    if n_total >= tile_n_max:
        tile_n = tile_n_max
    elif n_total >= 256:
        tile_n = 256
    elif n_total >= 128:
        tile_n = 128
    else:
        tile_n = _round_up(max(n_total, 8), 8)
    n_pad = _round_up(n_total, tile_n)

    # superpoint-axis tile (caps accumulator/one-hot VMEM; "parallel" over M tiles -> v7x 2 TCs)
    tile_m = min(_round_up(tile_m_max, 8), _round_up(m_total, 8))
    m_pad = _round_up(m_total, tile_m)

    # packed per-point input: [color+centered-xyz (6) | 0 0 | xyz | 1 | 0 0 0 0]
    pts = jnp.concatenate([
        feats2,
        jnp.zeros((n_total, PT_IN - AUX_W - feats2.shape[1]), jnp.float32),
        coord,
        jnp.ones((n_total, 1), jnp.float32),
        jnp.zeros((n_total, AUX_W - coord.shape[1] - 1), jnp.float32)], axis=1)
    pts = jnp.pad(pts, ((0, n_pad - n_total), (0, 0)))
    ids_p = jnp.pad(gids.astype(jnp.int32), (0, n_pad - n_total),
                    constant_values=-1).reshape(1, n_pad)

    grid = (m_pad // tile_m, n_pad // tile_n)
    out = pl.pallas_call(
        point_scatter_kernel,
        out_shape=jax.ShapeDtypeStruct((m_pad, SEG_W), jnp.float32),
        grid=grid,
        in_specs=[
            pl.BlockSpec((1, tile_n), lambda mi, t: (0, t)),         # superpoint ids
            pl.BlockSpec((tile_n, PT_IN), lambda mi, t: (t, 0)),     # packed per-point input
            _resident((PT_IN, 2 * NUM_CHANNELS)),                    # block-diag [w_in | w_pos1]
            _resident((1, NUM_CHANNELS)),                            # bn_scale
            _resident((1, NUM_CHANNELS)),                            # bn_shift
            _resident((1, NUM_CHANNELS)),                            # b_pos1
            _resident((1, NUM_CHANNELS)),                            # ln_g
            _resident((1, NUM_CHANNELS)),                            # ln_b
            _resident((NUM_CHANNELS, NUM_CHANNELS)),                 # w_pos2
            _resident((1, NUM_CHANNELS)),                            # b_pos2
        ],
        # accumulate directly into the resident output block (no extra scratch)
        out_specs=pl.BlockSpec((tile_m, SEG_W), lambda mi, t: (mi, 0)),
        compiler_params=pltpu.CompilerParams(
            dimension_semantics=("parallel", "arbitrary"),
            vmem_limit_bytes=vmem_limit),
    )(ids_p, pts,
      params["w_in_pos"], params["bn_scale"], params["bn_shift"],
      params["b_pos1"], params["ln_g"], params["ln_b"],
      params["w_pos2"], params["b_pos2"])
    return out[:m_total, :NUM_CHANNELS], out[:m_total, NUM_CHANNELS:NUM_CHANNELS + 3]


def run_decoder(params, x_sp, tile_m_max=512, vmem_limit=32 * 1024 * 1024):
    """Fused decoder + cls/score + alignment over all superpoints in one gridded call."""
    m_total = x_sp.shape[0]
    tile_m = min(_round_up(tile_m_max, 8), _round_up(m_total, 8))
    m_pad = _round_up(m_total, tile_m)

    x_in = jnp.pad(x_sp, ((0, m_pad - m_total), (0, 0))).astype(jnp.bfloat16)

    # TODO(synk): on v7x the constant-index weight specs could be single-buffered
    # (pipeline_mode=pl.Buffered(1)) to save ~1 MiB of VMEM headroom at larger tile_m.
    h1, al, score = pl.pallas_call(
        decoder_kernel,
        out_shape=(jax.ShapeDtypeStruct((m_pad, DEC_HIDDEN), jnp.bfloat16),
                   jax.ShapeDtypeStruct((m_pad, ALIGN_OUT), jnp.bfloat16),
                   jax.ShapeDtypeStruct((m_pad, SCORE_W), jnp.float32)),
        grid=(m_pad // tile_m,),
        in_specs=[
            pl.BlockSpec((tile_m, NUM_CHANNELS), lambda i: (i, 0)),
            _resident((NUM_CHANNELS, DEC_HIDDEN)),              # w_d1
            _resident((1, DEC_HIDDEN)),                         # b_d1
            _resident((DEC_HIDDEN, DEC_HIDDEN)),                # w_d2
            _resident((1, DEC_HIDDEN)),                         # b_d2
            _resident((DEC_HIDDEN, CLS_PAD)),                   # w_cls (padded)
            _resident((1, CLS_PAD)),                            # b_cls (padded)
            _resident((DEC_HIDDEN, ALIGN_OUT)),                 # w_al
            _resident((1, ALIGN_OUT)),                          # b_al
        ],
        out_specs=(pl.BlockSpec((tile_m, DEC_HIDDEN), lambda i: (i, 0)),
                   pl.BlockSpec((tile_m, ALIGN_OUT), lambda i: (i, 0)),
                   pl.BlockSpec((tile_m, SCORE_W), lambda i: (i, 0))),
        compiler_params=pltpu.CompilerParams(
            dimension_semantics=("parallel",),                  # shard row tiles across TCs
            vmem_limit_bytes=vmem_limit),
    )(x_in, params["w_d1"], params["b_d1"], params["w_d2"], params["b_d2"],
      params["w_cls"], params["b_cls"], params["w_al"], params["b_al"])
    return h1[:m_total], al[:m_total], score[:m_total, 0]


# ----------------------------------------------------------------------------- forward

def forward(params, feat, coord, sp_mask_list, sp_counts, num_topk=100,
            point_tile_n=1024, point_tile_m=512, dec_tile_m=512):
    """Mirrors OmniSuperPointTransformer.forward.

    feat:  (N_total, 6) per-point features, columns [xyz, color]
    coord: (N_total, 3) raw point coordinates
    sp_mask_list: list (len batch) of (N_i,) int32 per-batch superpoint ids in [0, M_i)
    sp_counts:    list (len batch) of M_i (number of superpoints per batch)
    """
    batch_size = len(sp_mask_list)

    # global superpoint ids (superpoint_bias) + batch offsets, as in the reference forward
    offsets = [0]
    for c in sp_counts:
        offsets.append(offsets[-1] + c)
    m_total = offsets[-1]
    gids = jnp.concatenate([sp_mask_list[i].astype(jnp.int32) + offsets[i]
                            for i in range(batch_size)])

    # feats = cat([feats[:,3:], feats[:,:3] - feats[:,:3].mean(0)], dim=1)
    xyz_mean = jnp.mean(feat[:, :3], axis=0, keepdims=True)
    feats2 = jnp.concatenate([feat[:, 3:], feat[:, :3] - xyz_mean], axis=1)   # (N, 6)

    # TODO(synk): voxelization (v2p/p2v maps), the 3x3x3 SubMConv3d neighborhood and the
    # SpConvUNet are data-dependent sparse gather/scatter with no clean Pallas equivalent;
    # only the pointwise center-tap projection + output_layer (BN eval + ReLU) are kept.
    x_sp, sp_xyz = run_point_scatter(params, feats2, coord, gids, m_total,
                                     tile_n_max=point_tile_n, tile_m_max=point_tile_m)

    # fused decoder stand-in + cls/score + alignment_proj, single gridded call over all batches
    h1_all, aligned_all, scores_all = run_decoder(params, x_sp, tile_m_max=dec_tile_m)

    # per-batch split (same as sp_batch_offsets slicing in the reference)
    x_list = [x_sp[offsets[i]:offsets[i + 1]] for i in range(batch_size)]
    xyz_list = [sp_xyz[offsets[i]:offsets[i + 1]] for i in range(batch_size)]
    hidden1_list = [h1_all[offsets[i]:offsets[i + 1]] for i in range(batch_size)]
    aligned_sp_feat = [aligned_all[offsets[i]:offsets[i + 1]] for i in range(batch_size)]
    scores_list = [scores_all[offsets[i]:offsets[i + 1]] for i in range(batch_size)]

    # per-batch top-k query selection (scores already fused into the decoder kernel)
    topk_query_feat, topk_query_coord = [], []
    for i in range(batch_size):
        num_keep = min(sp_counts[i], num_topk)
        _, topk_idx = jax.lax.top_k(scores_list[i], num_keep)   # sorted=True
        topk_query_feat.append(aligned_sp_feat[i][topk_idx])
        topk_query_coord.append(xyz_list[i][topk_idx])

    hidden_states = [hidden1_list]    # hidden_states[:-1] of the 2-layer stand-in decoder
    return (topk_query_feat, topk_query_coord, aligned_sp_feat,
            x_list, xyz_list, hidden_states)


# ----------------------------------------------------------------------------- main

if __name__ == "__main__":
    key = jax.random.PRNGKey(0)
    k_param, k_feat, k_coord, k_perm0, k_perm1 = jax.random.split(key, 5)

    params = init_params(k_param)

    batch_size = 2
    n_per_batch = 256          # points per batch  -> point grid has multiple tiles
    m_per_batch = 64           # superpoints per batch -> M / decoder grids have multiple tiles
    n_total = batch_size * n_per_batch

    feat = jax.random.normal(k_feat, (n_total, 6), jnp.float32)     # [xyz, color] per point
    coord = jax.random.normal(k_coord, (n_total, 3), jnp.float32)

    # superpoint ids per batch in [0, m_per_batch), every superpoint non-empty
    base = jnp.arange(n_per_batch, dtype=jnp.int32) % m_per_batch
    sp_mask_list = [
        base[jax.random.permutation(k_perm0, n_per_batch)],
        base[jax.random.permutation(k_perm1, n_per_batch)],
    ]
    sp_counts = [m_per_batch, m_per_batch]

    # small tiles in the demo so the 2-D point grid (M x N) and decoder grid run >1 step each
    outs = forward(params, feat, coord, sp_mask_list, sp_counts, num_topk=16,
                   point_tile_n=256, point_tile_m=64, dec_tile_m=64)
    jax.block_until_ready(outs)
    print("KERNEL_OK")
</pallas_src>

<mosaic_0001>
module attributes {stable_mosaic.version = 11 : i64} {
  func.func @point_scatter_kernel(%arg0: i32, %arg1: i32, %arg2: memref<1x256xi32, #tpu.memory_space<vmem>>, %arg3: memref<256x16xf32, #tpu.memory_space<vmem>>, %arg4: memref<16x64xf32, #tpu.memory_space<vmem>>, %arg5: memref<1x32xf32, #tpu.memory_space<vmem>>, %arg6: memref<1x32xf32, #tpu.memory_space<vmem>>, %arg7: memref<1x32xf32, #tpu.memory_space<vmem>>, %arg8: memref<1x32xf32, #tpu.memory_space<vmem>>, %arg9: memref<1x32xf32, #tpu.memory_space<vmem>>, %arg10: memref<32x32xf32, #tpu.memory_space<vmem>>, %arg11: memref<1x32xf32, #tpu.memory_space<vmem>>, %arg12: memref<64x40xf32, #tpu.memory_space<vmem>>) attributes {dimension_semantics = [#tpu.dimension_semantics<parallel>, #tpu.dimension_semantics<arbitrary>], iteration_bounds = array<i64: 2, 2>, scalar_prefetch = 0 : i64, scratch_operands = 0 : i64, tpu.core_type = #tpu.core_type<tc>, window_params = [{transform_indices = @transform_0, window_bounds = array<i64: 1, 256>}, {transform_indices = @transform_1, window_bounds = array<i64: 256, 16>}, {pipeline_mode = #tpu.pipeline_mode<synchronous>, transform_indices = @transform_2, window_bounds = array<i64: 16, 64>}, {pipeline_mode = #tpu.pipeline_mode<synchronous>, transform_indices = @transform_3, window_bounds = array<i64: 1, 32>}, {pipeline_mode = #tpu.pipeline_mode<synchronous>, transform_indices = @transform_4, window_bounds = array<i64: 1, 32>}, {pipeline_mode = #tpu.pipeline_mode<synchronous>, transform_indices = @transform_5, window_bounds = array<i64: 1, 32>}, {pipeline_mode = #tpu.pipeline_mode<synchronous>, transform_indices = @transform_6, window_bounds = array<i64: 1, 32>}, {pipeline_mode = #tpu.pipeline_mode<synchronous>, transform_indices = @transform_7, window_bounds = array<i64: 1, 32>}, {pipeline_mode = #tpu.pipeline_mode<synchronous>, transform_indices = @transform_8, window_bounds = array<i64: 32, 32>}, {pipeline_mode = #tpu.pipeline_mode<synchronous>, transform_indices = @transform_9, window_bounds = array<i64: 1, 32>}, {transform_indices = @transform_10, window_bounds = array<i64: 64, 40>}]} {
    %c0_i32 = arith.constant 0 : i32
    %0 = arith.cmpi eq, %arg1, %c0_i32 : i32
    %1 = arith.extui %0 : i1 to i32
    %c0_i32_0 = arith.constant 0 : i32
    %2 = arith.cmpi ne, %1, %c0_i32_0 : i32
    scf.if %2 {
      %cst_34 = arith.constant 0.000000e+00 : f32
      %71 = vector.broadcast %cst_34 : f32 to vector<64x40xf32>
      %c0_35 = arith.constant 0 : index
      %c0_36 = arith.constant 0 : index
      %72 = vector.load %arg12[%c0_35, %c0_36] : memref<64x40xf32, #tpu.memory_space<vmem>>, vector<64x40xf32>
      tpu.vector_store %arg12[%c0_35, %c0_36], %71 {strides = array<i32>} : memref<64x40xf32, #tpu.memory_space<vmem>>, vector<64x40xf32>,
    } else {
    }
    %c0 = arith.constant 0 : index
    %c0_1 = arith.constant 0 : index
    %3 = vector.load %arg3[%c0, %c0_1] : memref<256x16xf32, #tpu.memory_space<vmem>>, vector<256x16xf32>
    %c0_2 = arith.constant 0 : index
    %c0_3 = arith.constant 0 : index
    %4 = vector.load %arg4[%c0_2, %c0_3] : memref<16x64xf32, #tpu.memory_space<vmem>>, vector<16x64xf32>
    %cst = arith.constant dense<0.000000e+00> : vector<256x64xf32>
    %5 = tpu.matmul %3, %4, %cst {dimension_numbers = #tpu.dot_dimension_numbers<[1], [0], [0], [1], [0, 0, 1, 1], [], []>} : vector<256x16xf32>, vector<16x64xf32>, vector<256x64xf32> -> vector<256x64xf32>
    %6 = vector.extract_strided_slice %5 {offsets = [0, 0], sizes = [256, 32], strides = [1, 1]} : vector<256x64xf32> to vector<256x32xf32>
    %c0_4 = arith.constant 0 : index
    %c0_5 = arith.constant 0 : index
    %7 = vector.load %arg5[%c0_4, %c0_5] : memref<1x32xf32, #tpu.memory_space<vmem>>, vector<1x32xf32>
    %8 = vector.broadcast %7 : vector<1x32xf32> to vector<256x32xf32>
    %9 = arith.mulf %6, %8 : vector<256x32xf32>
    %c0_6 = arith.constant 0 : index
    %c0_7 = arith.constant 0 : index
    %10 = vector.load %arg6[%c0_6, %c0_7] : memref<1x32xf32, #tpu.memory_space<vmem>>, vector<1x32xf32>
    %11 = vector.broadcast %10 : vector<1x32xf32> to vector<256x32xf32>
    %12 = arith.addf %9, %11 : vector<256x32xf32>
    %cst_8 = arith.constant 0.000000e+00 : f32
    %13 = vector.broadcast %cst_8 : f32 to vector<256x32xf32>
    %14 = arith.maximumf %12, %13 : vector<256x32xf32>
    %15 = vector.extract_strided_slice %5 {offsets = [0, 32], sizes = [256, 32], strides = [1, 1]} : vector<256x64xf32> to vector<256x32xf32>
    %c0_9 = arith.constant 0 : index
    %c0_10 = arith.constant 0 : index
    %16 = vector.load %arg7[%c0_9, %c0_10] : memref<1x32xf32, #tpu.memory_space<vmem>>, vector<1x32xf32>
    %17 = vector.broadcast %16 : vector<1x32xf32> to vector<256x32xf32>
    %18 = arith.addf %15, %17 : vector<256x32xf32>
    %cst_11 = arith.constant dense<0.000000e+00> : vector<256xf32>
    %19 = vector.multi_reduction <add>, %18, %cst_11 [1] : vector<256x32xf32> to vector<256xf32>
    %20 = vector.shape_cast %19 : vector<256xf32> to vector<256x1xf32>
    %cst_12 = arith.constant 3.200000e+01 : f32
    %21 = vector.broadcast %cst_12 : f32 to vector<256x1xf32>
    %22 = arith.divf %20, %21 : vector<256x1xf32>
    %23 = vector.broadcast %22 : vector<256x1xf32> to vector<256x32xf32>
    %24 = arith.subf %18, %23 : vector<256x32xf32>
    %25 = arith.mulf %24, %24 : vector<256x32xf32>
    %cst_13 = arith.constant dense<0.000000e+00> : vector<256xf32>
    %26 = vector.multi_reduction <add>, %25, %cst_13 [1] : vector<256x32xf32> to vector<256xf32>
    %27 = vector.shape_cast %26 : vector<256xf32> to vector<256x1xf32>
    %cst_14 = arith.constant 3.200000e+01 : f32
    %28 = vector.broadcast %cst_14 : f32 to vector<256x1xf32>
    %29 = arith.divf %27, %28 : vector<256x1xf32>
    %30 = vector.broadcast %22 : vector<256x1xf32> to vector<256x32xf32>
    %31 = arith.subf %18, %30 : vector<256x32xf32>
    %cst_15 = arith.constant 9.99999974E-6 : f32
    %32 = vector.broadcast %cst_15 : f32 to vector<256x1xf32>
    %33 = arith.addf %29, %32 : vector<256x1xf32>
    %34 = math.rsqrt %33 : vector<256x1xf32>
    %35 = vector.broadcast %34 : vector<256x1xf32> to vector<256x32xf32>
    %36 = arith.mulf %31, %35 : vector<256x32xf32>
    %c0_16 = arith.constant 0 : index
    %c0_17 = arith.constant 0 : index
    %37 = vector.load %arg8[%c0_16, %c0_17] : memref<1x32xf32, #tpu.memory_space<vmem>>, vector<1x32xf32>
    %38 = vector.broadcast %37 : vector<1x32xf32> to vector<256x32xf32>
    %39 = arith.mulf %36, %38 : vector<256x32xf32>
    %c0_18 = arith.constant 0 : index
    %c0_19 = arith.constant 0 : index
    %40 = vector.load %arg9[%c0_18, %c0_19] : memref<1x32xf32, #tpu.memory_space<vmem>>, vector<1x32xf32>
    %41 = vector.broadcast %40 : vector<1x32xf32> to vector<256x32xf32>
    %42 = arith.addf %39, %41 : vector<256x32xf32>
    %cst_20 = arith.constant 0.000000e+00 : f32
    %43 = vector.broadcast %cst_20 : f32 to vector<256x32xf32>
    %44 = arith.maximumf %42, %43 : vector<256x32xf32>
    %c0_21 = arith.constant 0 : index
    %c0_22 = arith.constant 0 : index
    %45 = vector.load %arg10[%c0_21, %c0_22] : memref<32x32xf32, #tpu.memory_space<vmem>>, vector<32x32xf32>
    %cst_23 = arith.constant dense<0.000000e+00> : vector<256x32xf32>
    %46 = tpu.matmul %44, %45, %cst_23 {dimension_numbers = #tpu.dot_dimension_numbers<[1], [0], [0], [1], [0, 0, 1, 1], [], []>} : vector<256x32xf32>, vector<32x32xf32>, vector<256x32xf32> -> vector<256x32xf32>
    %c0_24 = arith.constant 0 : index
    %c0_25 = arith.constant 0 : index
    %47 = vector.load %arg11[%c0_24, %c0_25] : memref<1x32xf32, #tpu.memory_space<vmem>>, vector<1x32xf32>
    %48 = vector.broadcast %47 : vector<1x32xf32> to vector<256x32xf32>
    %49 = arith.addf %46, %48 : vector<256x32xf32>
    %50 = arith.addf %14, %49 : vector<256x32xf32>
    %51 = vector.extract_strided_slice %3 {offsets = [0, 8], sizes = [256, 8], strides = [1, 1]} : vector<256x16xf32> to vector<256x8xf32>
    %52 = tpu.concatenate %50, %51 in 1 : vector<256x32xf32>, vector<256x8xf32> -> vector<256x40xf32>
    %53 = arith.truncf %52 : vector<256x40xf32> to vector<256x40xbf16>
    %c0_26 = arith.constant 0 : index
    %c0_27 = arith.constant 0 : index
    %54 = vector.load %arg2[%c0_26, %c0_27] : memref<1x256xi32, #tpu.memory_space<vmem>>, vector<1x256xi32>
    %55 = tpu.iota {dimensions = array<i32: 0>} : vector<64x256xi32>
    %c64_i32 = arith.constant 64 : i32
    %56 = arith.muli %arg0, %c64_i32 : i32
    %57 = vector.broadcast %56 : i32 to vector<64x256xi32>
    %58 = arith.addi %55, %57 : vector<64x256xi32>
    %59 = vector.broadcast %54 : vector<1x256xi32> to vector<64x256xi32>
    %60 = arith.cmpi eq, %58, %59 : vector<64x256xi32>
    %61 = arith.extui %60 : vector<64x256xi1> to vector<64x256xi32>
    %62 = arith.sitofp %61 : vector<64x256xi32> to vector<64x256xf32>
    %63 = arith.truncf %62 : vector<64x256xf32> to vector<64x256xbf16>
    %c0_28 = arith.constant 0 : index
    %c0_29 = arith.constant 0 : index
    %64 = vector.load %arg12[%c0_28, %c0_29] : memref<64x40xf32, #tpu.memory_space<vmem>>, vector<64x40xf32>
    %cst_30 = arith.constant dense<0.000000e+00> : vector<64x40xf32>
    %65 = tpu.matmul %63, %53, %cst_30 {dimension_numbers = #tpu.dot_dimension_numbers<[1], [0], [0], [1], [0, 0, 1, 1], [], []>} : vector<64x256xbf16>, vector<256x40xbf16>, vector<64x40xf32> -> vector<64x40xf32>
    %66 = arith.addf %64, %65 : vector<64x40xf32>
    %c0_31 = arith.constant 0 : index
    %c0_32 = arith.constant 0 : index
    %67 = vector.load %arg12[%c0_31, %c0_32] : memref<64x40xf32, #tpu.memory_space<vmem>>, vector<64x40xf32>
    tpu.vector_store %arg12[%c0_31, %c0_32], %66 {strides = array<i32>} : memref<64x40xf32, #tpu.memory_space<vmem>>, vector<64x40xf32>,
    %c1_i32 = arith.constant 1 : i32
    %68 = arith.cmpi eq, %arg1, %c1_i32 : i32
    %69 = arith.extui %68 : i1 to i32
    %c0_i32_33 = arith.constant 0 : i32
    %70 = arith.cmpi ne, %69, %c0_i32_33 : i32
    scf.if %70 {
      %c0_34 = arith.constant 0 : index
      %c0_35 = arith.constant 0 : index
      %71 = vector.load %arg12[%c0_34, %c0_35] : memref<64x40xf32, #tpu.memory_space<vmem>>, vector<64x40xf32>
      %72 = vector.extract_strided_slice %71 {offsets = [0, 35], sizes = [64, 1], strides = [1, 1]} : vector<64x40xf32> to vector<64x1xf32>
      %cst_36 = arith.constant 1.000000e+00 : f32
      %73 = vector.broadcast %cst_36 : f32 to vector<64x1xf32>
      %74 = arith.maximumf %72, %73 : vector<64x1xf32>
      %cst_37 = arith.constant 1.000000e+00 : f32
      %75 = vector.broadcast %cst_37 : f32 to vector<64x1xf32>
      %76 = arith.divf %75, %74 : vector<64x1xf32>
      %77 = vector.broadcast %76 : vector<64x1xf32> to vector<64x40xf32>
      %78 = arith.mulf %71, %77 : vector<64x40xf32>
      %c0_38 = arith.constant 0 : index
      %c0_39 = arith.constant 0 : index
      %79 = vector.load %arg12[%c0_38, %c0_39] : memref<64x40xf32, #tpu.memory_space<vmem>>, vector<64x40xf32>
      tpu.vector_store %arg12[%c0_38, %c0_39], %78 {strides = array<i32>} : memref<64x40xf32, #tpu.memory_space<vmem>>, vector<64x40xf32>,
    } else {
    }
    return
  }
  func.func @transform_0(%arg0: i32, %arg1: i32) -> (i32, i32) {
    %c0_i32 = arith.constant 0 : i32
    %c0_i32_0 = arith.constant 0 : i32
    return %c0_i32, %arg1 : i32, i32
  }
  func.func @transform_1(%arg0: i32, %arg1: i32) -> (i32, i32) {
    %c0_i32 = arith.constant 0 : i32
    %c0_i32_0 = arith.constant 0 : i32
    return %arg1, %c0_i32 : i32, i32
  }
  func.func @transform_2(%arg0: i32, %arg1: i32) -> (i32, i32) {
    %c0_i32 = arith.constant 0 : i32
    %c0_i32_0 = arith.constant 0 : i32
    %c0_i32_1 = arith.constant 0 : i32
    return %c0_i32, %c0_i32_0 : i32, i32
  }
  func.func @transform_3(%arg0: i32, %arg1: i32) -> (i32, i32) {
    %c0_i32 = arith.constant 0 : i32
    %c0_i32_0 = arith.constant 0 : i32
    %c0_i32_1 = arith.constant 0 : i32
    return %c0_i32, %c0_i32_0 : i32, i32
  }
  func.func @transform_4(%arg0: i32, %arg1: i32) -> (i32, i32) {
    %c0_i32 = arith.constant 0 : i32
    %c0_i32_0 = arith.constant 0 : i32
    %c0_i32_1 = arith.constant 0 : i32
    return %c0_i32, %c0_i32_0 : i32, i32
  }
  func.func @transform_5(%arg0: i32, %arg1: i32) -> (i32, i32) {
    %c0_i32 = arith.constant 0 : i32
    %c0_i32_0 = arith.constant 0 : i32
    %c0_i32_1 = arith.constant 0 : i32
    return %c0_i32, %c0_i32_0 : i32, i32
  }
  func.func @transform_6(%arg0: i32, %arg1: i32) -> (i32, i32) {
    %c0_i32 = arith.constant 0 : i32
    %c0_i32_0 = arith.constant 0 : i32
    %c0_i32_1 = arith.constant 0 : i32
    return %c0_i32, %c0_i32_0 : i32, i32
  }
  func.func @transform_7(%arg0: i32, %arg1: i32) -> (i32, i32) {
    %c0_i32 = arith.constant 0 : i32
    %c0_i32_0 = arith.constant 0 : i32
    %c0_i32_1 = arith.constant 0 : i32
    return %c0_i32, %c0_i32_0 : i32, i32
  }
  func.func @transform_8(%arg0: i32, %arg1: i32) -> (i32, i32) {
    %c0_i32 = arith.constant 0 : i32
    %c0_i32_0 = arith.constant 0 : i32
    %c0_i32_1 = arith.constant 0 : i32
    return %c0_i32, %c0_i32_0 : i32, i32
  }
  func.func @transform_9(%arg0: i32, %arg1: i32) -> (i32, i32) {
    %c0_i32 = arith.constant 0 : i32
    %c0_i32_0 = arith.constant 0 : i32
    %c0_i32_1 = arith.constant 0 : i32
    return %c0_i32, %c0_i32_0 : i32, i32
  }
  func.func @transform_10(%arg0: i32, %arg1: i32) -> (i32, i32) {
    %c0_i32 = arith.constant 0 : i32
    %c0_i32_0 = arith.constant 0 : i32
    return %arg0, %c0_i32 : i32, i32
  }
}

</mosaic_0001>

<llo_original>
// kernel: tpu_custom_call.1
$region0: #{tpu_custom_call.1}
  #allocation0 [shape = 'u32[]', space=smem, size = 0x4, offset = 0x4, fixed_abs, tag = 'smem constant byte address 0x4 - core index']
  #allocation1 [shape = 'u32[72,128]{1,0:T(1,128)}', space=vmem, size = 0x9000, scoped, tag = 'internal scratch']
  %s0 = inlined_call_operand.vmem [shape: s32[1,512], index: 0, kind: input, shape index: {}]
  %s1 = inlined_call_operand.vmem [shape: f32[512,16], index: 1, kind: input, shape index: {}]
  %s2 = inlined_call_operand.vmem [shape: f32[16,64], index: 2, kind: input, shape index: {}]
  %s3 = inlined_call_operand.vmem [shape: f32[1,32], index: 3, kind: input, shape index: {}]
  %s4 = inlined_call_operand.vmem [shape: f32[1,32], index: 4, kind: input, shape index: {}]
  %s5 = inlined_call_operand.vmem [shape: f32[1,32], index: 5, kind: input, shape index: {}]
  %s6 = inlined_call_operand.vmem [shape: f32[1,32], index: 6, kind: input, shape index: {}]
  %s7 = inlined_call_operand.vmem [shape: f32[1,32], index: 7, kind: input, shape index: {}]
  %s8 = inlined_call_operand.vmem [shape: f32[32,32], index: 8, kind: input, shape index: {}]
  %s9 = inlined_call_operand.vmem [shape: f32[1,32], index: 9, kind: input, shape index: {}]
  %s10 = inlined_call_operand.vmem [shape: f32[128,40], index: 10, kind: output, shape index: {}]
  %s11 = sld [smem:[#allocation0]]
  $region81: #{tpu_custom_call.1} parent=0
    _
  %s13 = ssub.s32 1, %s11
  %s14 = scalar_select 0, %s13, %s11
  loop: start=0, step=1, limit=6
  $region2: #{tpu_custom_call.1} parent=0 // loop_pre_header
    _
  $region3: #{tpu_custom_call.1} parent=0 // loop_header
    %s16 = sphi 0, %s20
    %p17 = scmp.ge.s32.totalorder %s16, 6
    %s23 = sphi 0, %s35
    %s24 = sphi 0, %s31
    %s25 = sphi 0, %s23
    %s26 = sphi 0, %s24
    %s27 = sphi 0, %s25
    %s28 = sphi 0, %s26
    %s38 = sphi 0, %s40
    %s41 = sphi 0, %s38
    %s42 = sphi 0, %s41
    %s58 = sphi 0, %s42
    %s64 = sphi 0, %s66
    %s67 = sphi 0, %s64
    %s68 = sphi 0, %s67
    %s84 = sphi 0, %s68
    %s88 = sphi 0, %s88
    %s90 = sphi 0, %s88
    %s91 = sphi 0, %s90
    %s105 = sphi 0, %s91
    %s109 = sphi 0, %s109
    %s111 = sphi 0, %s109
    %s112 = sphi 0, %s111
    %s126 = sphi 0, %s112
    %s130 = sphi 0, %s130
    %s132 = sphi 0, %s130
    %s133 = sphi 0, %s132
    %s147 = sphi 0, %s133
    %s151 = sphi 0, %s151
    %s153 = sphi 0, %s151
    %s154 = sphi 0, %s153
    %s168 = sphi 0, %s154
    %s172 = sphi 0, %s172
    %s174 = sphi 0, %s172
    %s175 = sphi 0, %s174
    %s189 = sphi 0, %s175
    %s193 = sphi 0, %s193
    %s195 = sphi 0, %s193
    %s196 = sphi 0, %s195
    %s210 = sphi 0, %s196
    %s214 = sphi 0, %s214
    %s216 = sphi 0, %s214
    %s217 = sphi 0, %s216
    %s231 = sphi 0, %s217
    %s235 = sphi 0, %s235
    %s237 = sphi 0, %s235
    %s238 = sphi 0, %s237
    %s252 = sphi 0, %s238
    %s258 = sphi 0, %s260
    %s261 = sphi 0, %s258
    %s262 = sphi 0, %s261
    %s278 = sphi 0, %s262
  $region4: #{tpu_custom_call.1} parent=0 // loop_header_branch
    %19 = sbr.rel (%p17) target = $region8
  $region5: #{tpu_custom_call.1} parent=0 // loop_body
    %s21 = ssub.s32 %s16, 1
    %s22 = ssub.s32 %s16, 2
    %s29 = sadd.s32 1, %s24
    %p30 = scmp.ge.s32.totalorder %s29, 2
    %s31 = scalar_select %p30, 0, %s29
    %s32 = sadd.s32 1, %s23
    %s33 = scalar_select %p30, %s32, %s23
    %p34 = scmp.ge.s32.totalorder %s33, 2
    %s35 = scalar_select %p34, 0, %s33
    %s36 = ssub.s32 %s24, %s31
    %p37 = scmp.eq.s32.totalorder %s36, 0
    %s39 = sadd.s32 %s38, 1
    %s40 = scalar_select %p37, %s38, %s39
    %p43 = pneg %p37
    %p44 = scmp.eq.s32.totalorder %s16, 3
    %p45 = por %p43, %p44
    %p46 = scmp.ne.s32.totalorder %s38, %s41
    %p47 = scmp.eq.s32.totalorder %s16, 0
    %p48 = por %p46, %p47
    %p49 = scmp.ne.s32.totalorder %s38, %s41
    %p50 = scmp.eq.s32.totalorder %s21, 3
    %p51 = por %p49, %p50
    %p52 = scmp.ne.s32.totalorder %s41, %s42
    %p53 = scmp.eq.s32.totalorder %s21, 0
    %p54 = por %p52, %p53
    %p55 = scmp.ne.s32.totalorder %s41, %s42
    %p56 = scmp.eq.s32.totalorder %s22, 3
    %p57 = por %p55, %p56
    %p59 = scmp.ne.s32.totalorder %s42, %s58
    %p60 = scmp.eq.s32.totalorder %s22, 0
    %p61 = por %p59, %p60
    %s62 = ssub.s32 %s24, %s31
    %p63 = scmp.eq.s32.totalorder %s62, 0
    %s65 = sadd.s32 %s64, 1
    %s66 = scalar_select %p63, %s64, %s65
    %p69 = pneg %p63
    %p70 = scmp.eq.s32.totalorder %s16, 3
    %p71 = por %p69, %p70
    %p72 = scmp.ne.s32.totalorder %s64, %s67
    %p73 = scmp.eq.s32.totalorder %s16, 0
    %p74 = por %p72, %p73
    %p75 = scmp.ne.s32.totalorder %s64, %s67
    %p76 = scmp.eq.s32.totalorder %s21, 3
    %p77 = por %p75, %p76
    %p78 = scmp.ne.s32.totalorder %s67, %s68
    %p79 = scmp.eq.s32.totalorder %s21, 0
    %p80 = por %p78, %p79
    %p81 = scmp.ne.s32.totalorder %s67, %s68
    %p82 = scmp.eq.s32.totalorder %s22, 3
    %p83 = por %p81, %p82
    %p85 = scmp.ne.s32.totalorder %s68, %s84
    %p86 = scmp.eq.s32.totalorder %s22, 0
    %p87 = por %p85, %p86
    %s89 = sadd.s32 %s88, 1
    %p92 = scmp.eq.s32.totalorder %s16, 3
    %p93 = scmp.ne.s32.totalorder %s88, %s90
    %p94 = scmp.eq.s32.totalorder %s16, 0
    %p95 = por %p93, %p94
    %p96 = scmp.ne.s32.totalorder %s88, %s90
    %p97 = scmp.eq.s32.totalorder %s21, 3
    %p98 = por %p96, %p97
    %p99 = scmp.ne.s32.totalorder %s90, %s91
    %p100 = scmp.eq.s32.totalorder %s21, 0
    %p101 = por %p99, %p100
    %p102 = scmp.ne.s32.totalorder %s90, %s91
    %p103 = scmp.eq.s32.totalorder %s22, 3
    %p104 = por %p102, %p103
    %p106 = scmp.ne.s32.totalorder %s91, %s105
    %p107 = scmp.eq.s32.totalorder %s22, 0
    %p108 = por %p106, %p107
    %s110 = sadd.s32 %s109, 1
    %p113 = scmp.eq.s32.totalorder %s16, 3
    %p114 = scmp.ne.s32.totalorder %s109, %s111
    %p115 = scmp.eq.s32.totalorder %s16, 0
    %p116 = por %p114, %p115
    %p117 = scmp.ne.s32.totalorder %s109, %s111
    %p118 = scmp.eq.s32.totalorder %s21, 3
    %p119 = por %p117, %p118
    %p120 = scmp.ne.s32.totalorder %s111, %s112
    %p121 = scmp.eq.s32.totalorder %s21, 0
    %p122 = por %p120, %p121
    %p123 = scmp.ne.s32.totalorder %s111, %s112
    %p124 = scmp.eq.s32.totalorder %s22, 3
    %p125 = por %p123, %p124
    %p127 = scmp.ne.s32.totalorder %s112, %s126
    %p128 = scmp.eq.s32.totalorder %s22, 0
    %p129 = por %p127, %p128
    %s131 = sadd.s32 %s130, 1
    %p134 = scmp.eq.s32.totalorder %s16, 3
    %p135 = scmp.ne.s32.totalorder %s130, %s132
    %p136 = scmp.eq.s32.totalorder %s16, 0
    %p137 = por %p135, %p136
    %p138 = scmp.ne.s32.totalorder %s130, %s132
    %p139 = scmp.eq.s32.totalorder %s21, 3
    %p140 = por %p138, %p139
    %p141 = scmp.ne.s32.totalorder %s132, %s133
    %p142 = scmp.eq.s32.totalorder %s21, 0
    %p143 = por %p141, %p142
    %p144 = scmp.ne.s32.totalorder %s132, %s133
    %p145 = scmp.eq.s32.totalorder %s22, 3
    %p146 = por %p144, %p145
    %p148 = scmp.ne.s32.totalorder %s133, %s147
    %p149 = scmp.eq.s32.totalorder %s22, 0
    %p150 = por %p148, %p149
    %s152 = sadd.s32 %s151, 1
    %p155 = scmp.eq.s32.totalorder %s16, 3
    %p156 = scmp.ne.s32.totalorder %s151, %s153
    %p157 = scmp.eq.s32.totalorder %s16, 0
    %p158 = por %p156, %p157
    %p159 = scmp.ne.s32.totalorder %s151, %s153
    %p160 = scmp.eq.s32.totalorder %s21, 3
    %p161 = por %p159, %p160
    %p162 = scmp.ne.s32.totalorder %s153, %s154
    %p163 = scmp.eq.s32.totalorder %s21, 0
    %p164 = por %p162, %p163
    %p165 = scmp.ne.s32.totalorder %s153, %s154
    %p166 = scmp.eq.s32.totalorder %s22, 3
    %p167 = por %p165, %p166
    %p169 = scmp.ne.s32.totalorder %s154, %s168
    %p170 = scmp.eq.s32.totalorder %s22, 0
    %p171 = por %p169, %p170
    %s173 = sadd.s32 %s172, 1
    %p176 = scmp.eq.s32.totalorder %s16, 3
    %p177 = scmp.ne.s32.totalorder %s172, %s174
    %p178 = scmp.eq.s32.totalorder %s16, 0
    %p179 = por %p177, %p178
    %p180 = scmp.ne.s32.totalorder %s172, %s174
    %p181 = scmp.eq.s32.totalorder %s21, 3
    %p182 = por %p180, %p181
    %p183 = scmp.ne.s32.totalorder %s174, %s175
    %p184 = scmp.eq.s32.totalorder %s21, 0
    %p185 = por %p183, %p184
    %p186 = scmp.ne.s32.totalorder %s174, %s175
    %p187 = scmp.eq.s32.totalorder %s22, 3
    %p188 = por %p186, %p187
    %p190 = scmp.ne.s32.totalorder %s175, %s189
    %p191 = scmp.eq.s32.totalorder %s22, 0
    %p192 = por %p190, %p191
    %s194 = sadd.s32 %s193, 1
    %p197 = scmp.eq.s32.totalorder %s16, 3
    %p198 = scmp.ne.s32.totalorder %s193, %s195
    %p199 = scmp.eq.s32.totalorder %s16, 0
    %p200 = por %p198, %p199
    %p201 = scmp.ne.s32.totalorder %s193, %s195
    %p202 = scmp.eq.s32.totalorder %s21, 3
    %p203 = por %p201, %p202
    %p204 = scmp.ne.s32.totalorder %s195, %s196
    %p205 = scmp.eq.s32.totalorder %s21, 0
    %p206 = por %p204, %p205
    %p207 = scmp.ne.s32.totalorder %s195, %s196
    %p208 = scmp.eq.s32.totalorder %s22, 3
    %p209 = por %p207, %p208
    %p211 = scmp.ne.s32.totalorder %s196, %s210
    %p212 = scmp.eq.s32.totalorder %s22, 0
    %p213 = por %p211, %p212
    %s215 = sadd.s32 %s214, 1
    %p218 = scmp.eq.s32.totalorder %s16, 3
    %p219 = scmp.ne.s32.totalorder %s214, %s216
    %p220 = scmp.eq.s32.totalorder %s16, 0
    %p221 = por %p219, %p220
    %p222 = scmp.ne.s32.totalorder %s214, %s216
    %p223 = scmp.eq.s32.totalorder %s21, 3
    %p224 = por %p222, %p223
    %p225 = scmp.ne.s32.totalorder %s216, %s217
    %p226 = scmp.eq.s32.totalorder %s21, 0
    %p227 = por %p225, %p226
    %p228 = scmp.ne.s32.totalorder %s216, %s217
    %p229 = scmp.eq.s32.totalorder %s22, 3
    %p230 = por %p228, %p229
    %p232 = scmp.ne.s32.totalorder %s217, %s231
    %p233 = scmp.eq.s32.totalorder %s22, 0
    %p234 = por %p232, %p233
    %s236 = sadd.s32 %s235, 1
    %p239 = scmp.eq.s32.totalorder %s16, 3
    %p240 = scmp.ne.s32.totalorder %s235, %s237
    %p241 = scmp.eq.s32.totalorder %s16, 0
    %p242 = por %p240, %p241
    %p243 = scmp.ne.s32.totalorder %s235, %s237
    %p244 = scmp.eq.s32.totalorder %s21, 3
    %p245 = por %p243, %p244
    %p246 = scmp.ne.s32.totalorder %s237, %s238
    %p247 = scmp.eq.s32.totalorder %s21, 0
    %p248 = por %p246, %p247
    %p249 = scmp.ne.s32.totalorder %s237, %s238
    %p250 = scmp.eq.s32.totalorder %s22, 3
    %p251 = por %p249, %p250
    %p253 = scmp.ne.s32.totalorder %s238, %s252
    %p254 = scmp.eq.s32.totalorder %s22, 0
    %p255 = por %p253, %p254
    %s256 = ssub.s32 %s23, %s35
    %p257 = scmp.eq.s32.totalorder %s256, 0
    %s259 = sadd.s32 %s258, 1
    %s260 = scalar_select %p257, %s258, %s259
    %p263 = pneg %p257
    %p264 = scmp.eq.s32.totalorder %s16, 3
    %p265 = por %p263, %p264
    %p266 = scmp.ne.s32.totalorder %s258, %s261
    %p267 = scmp.eq.s32.totalorder %s16, 0
    %p268 = por %p266, %p267
    %p269 = scmp.ne.s32.totalorder %s258, %s261
    %p270 = scmp.eq.s32.totalorder %s21, 3
    %p271 = por %p269, %p270
    %p272 = scmp.ne.s32.totalorder %s261, %s262
    %p273 = scmp.eq.s32.totalorder %s21, 0
    %p274 = por %p272, %p273
    %p275 = scmp.ne.s32.totalorder %s261, %s262
    %p276 = scmp.eq.s32.totalorder %s22, 3
    %p277 = por %p275, %p276
    %p279 = scmp.ne.s32.totalorder %s262, %s278
    %p280 = scmp.eq.s32.totalorder %s22, 0
    %p281 = por %p279, %p280
    %p282 = scmp.le.s32.totalorder 1, %s16
    %p283 = scmp.lt.s32.totalorder %s16, 5
    %p284 = pnand %p282, %p283
    %p285 = pneg %p284
    // Predicated region
    $region9: #{tpu_custom_call.1} parent=5 // pred_check
      _
    $region10: #{tpu_custom_call.1} parent=5 // pred_check_branch
      %287 = sbr.rel (%p284) target = $region12
    $region11: #{tpu_custom_call.1} parent=5 // pred_region
      %s288 = ssub.s32 %s16, 1
      // Predicated region
      $region13: #{tpu_custom_call.1} parent=11 // pred_check
        %p289 = pneg %p101
      $region14: #{tpu_custom_call.1} parent=11 // pred_check_branch
        %291 = sbr.rel (%p289) target = $region16
      $region15: #{tpu_custom_call.1} parent=11 // pred_region
        _
      $region16: #{tpu_custom_call.1} parent=11 // pred_fallthru
        _
      // Predicated region
      $region17: #{tpu_custom_call.1} parent=11 // pred_check
        %p292 = pneg %p122
      $region18: #{tpu_custom_call.1} parent=11 // pred_check_branch
        %294 = sbr.rel (%p292) target = $region20
      $region19: #{tpu_custom_call.1} parent=11 // pred_region
        _
      $region20: #{tpu_custom_call.1} parent=11 // pred_fallthru
        _
      // Predicated region
      $region21: #{tpu_custom_call.1} parent=11 // pred_check
        %p295 = pneg %p143
      $region22: #{tpu_custom_call.1} parent=11 // pred_check_branch
        %297 = sbr.rel (%p295) target = $region24
      $region23: #{tpu_custom_call.1} parent=11 // pred_region
        _
      $region24: #{tpu_custom_call.1} parent=11 // pred_fallthru
        _
      // Predicated region
      $region25: #{tpu_custom_call.1} parent=11 // pred_check
        %p298 = pneg %p164
      $region26: #{tpu_custom_call.1} parent=11 // pred_check_branch
        %300 = sbr.rel (%p298) target = $region28
      $region27: #{tpu_custom_call.1} parent=11 // pred_region
        _
      $region28: #{tpu_custom_call.1} parent=11 // pred_fallthru
        _
      // Predicated region
      $region29: #{tpu_custom_call.1} parent=11 // pred_check
        %p301 = pneg %p185
      $region30: #{tpu_custom_call.1} parent=11 // pred_check_branch
        %303 = sbr.rel (%p301) target = $region32
      $region31: #{tpu_custom_call.1} parent=11 // pred_region
        _
      $region32: #{tpu_custom_call.1} parent=11 // pred_fallthru
        _
      // Predicated region
      $region33: #{tpu_custom_call.1} parent=11 // pred_check
        %p304 = pneg %p206
      $region34: #{tpu_custom_call.1} parent=11 // pred_check_branch
        %306 = sbr.rel (%p304) target = $region36
      $region35: #{tpu_custom_call.1} parent=11 // pred_region
        _
      $region36: #{tpu_custom_call.1} parent=11 // pred_fallthru
        _
      // Predicated region
      $region37: #{tpu_custom_call.1} parent=11 // pred_check
        %p307 = pneg %p227
      $region38: #{tpu_custom_call.1} parent=11 // pred_check_branch
        %309 = sbr.rel (%p307) target = $region40
      $region39: #{tpu_custom_call.1} parent=11 // pred_region
        _
      $region40: #{tpu_custom_call.1} parent=11 // pred_fallthru
        _
      // Predicated region
      $region41: #{tpu_custom_call.1} parent=11 // pred_check
        %p310 = pneg %p248
      $region42: #{tpu_custom_call.1} parent=11 // pred_check_branch
        %312 = sbr.rel (%p310) target = $region44
      $region43: #{tpu_custom_call.1} parent=11 // pred_region
        _
      $region44: #{tpu_custom_call.1} parent=11 // pred_fallthru
        _
    $region12: #{tpu_custom_call.1} parent=5 // pred_fallthru
      _
    %p313 = scmp.lt.s32.totalorder %s16, 4
    // Predicated region
    $region45: #{tpu_custom_call.1} parent=5 // pred_check
      %p314 = pneg %p313
    $region46: #{tpu_custom_call.1} parent=5 // pred_check_branch
      %316 = sbr.rel (%p314) target = $region48
    $region47: #{tpu_custom_call.1} parent=5 // pred_region
      // Predicated region
      $region49: #{tpu_custom_call.1} parent=47 // pred_check
        %p317 = pneg %p48
      $region50: #{tpu_custom_call.1} parent=47 // pred_check_branch
        %319 = sbr.rel (%p317) target = $region52
      $region51: #{tpu_custom_call.1} parent=47 // pred_region
        %s320 = smul.u32 2, %s24
        %p321 = scmp.lt.s32.totalorder %s320, 3
        %s322 = scalar_select %p321, %s320, 3
        %s323 = scalar_lea.vmem %s0, %s322
        %s324 = smul.u32 2, %s24
      $region52: #{tpu_custom_call.1} parent=47 // pred_fallthru
        _
      // Predicated region
      $region53: #{tpu_custom_call.1} parent=47 // pred_check
        %p325 = pneg %p74
      $region54: #{tpu_custom_call.1} parent=47 // pred_check_branch
        %327 = sbr.rel (%p325) target = $region56
      $region55: #{tpu_custom_call.1} parent=47 // pred_region
        %s328 = smul.u32 32, %s24
        %p329 = scmp.lt.s32.totalorder %s328, 63
        %s330 = scalar_select %p329, %s328, 63
        %s331 = smul.addr %s330, 8
        %s332 = scalar_lea.vmem %s1, %s331
        %s333 = smul.u32 32, %s24
      $region56: #{tpu_custom_call.1} parent=47 // pred_fallthru
        _
    $region48: #{tpu_custom_call.1} parent=5 // pred_fallthru
      _
    %p334 = scmp.le.s32.totalorder 1, %s16
    %p335 = scmp.lt.s32.totalorder %s16, 5
    %p336 = pnand %p334, %p335
    %p337 = pneg %p336
    // Predicated region
    $region57: #{tpu_custom_call.1} parent=5 // pred_check
      _
    $region58: #{tpu_custom_call.1} parent=5 // pred_check_branch
      %339 = sbr.rel (%p336) target = $region60
    $region59: #{tpu_custom_call.1} parent=5 // pred_region
      %s340 = ssub.s32 %s16, 1
      %s341 = smul.u32 2, %s26
      %p342 = scmp.lt.s32.totalorder %s341, 3
      %s343 = scalar_select %p342, %s341, 3
      %s344 = scalar_lea.vmem %s0, %s343
      %p345 = pneg %p54
      %p346 = pneg %p51
      %s347 = smul.u32 32, %s26
      %p348 = scmp.lt.s32.totalorder %s347, 63
      %s349 = scalar_select %p348, %s347, 63
      %s350 = smul.addr %s349, 8
      %s351 = scalar_lea.vmem %s1, %s350
      %p352 = pneg %p80
      %p353 = pneg %p77
      %p354 = pneg %p101
      %p355 = pneg %p98
      %p356 = pneg %p122
      %p357 = pneg %p119
      %p358 = pneg %p143
      %p359 = pneg %p140
      %p360 = pneg %p164
      %p361 = pneg %p161
      %p362 = pneg %p185
      %p363 = pneg %p182
      %p364 = pneg %p206
      %p365 = pneg %p203
      %p366 = pneg %p227
      %p367 = pneg %p224
      %p368 = pneg %p248
      %p369 = pneg %p245
      %p370 = pneg %p274
      %p371 = pneg %p271
      %s372 = smul.u32 8, %s25
      %p373 = scmp.lt.s32.totalorder %s372, 15
      %s374 = scalar_select %p373, %s372, 15
      %s375 = smul.addr %s374, 8
      %s376 = scalar_lea.vmem %s10, %s375
      %s377 = smul.u32 2, %s26
      %p378 = scmp.lt.s32.totalorder %s377, 3
      %s379 = scalar_select %p378, %s377, 3
      %s380 = scalar_lea.vmem %s0, %s379
      %s381 = smul.u32 2, %s26
      %s382 = smul.u32 32, %s26
      %p383 = scmp.lt.s32.totalorder %s382, 63
      %s384 = scalar_select %p383, %s382, 63
      %s385 = smul.addr %s384, 8
      %s386 = scalar_lea.vmem %s1, %s385
      %s387 = smul.u32 32, %s26
      %s388 = smul.u32 8, %s25
      %p389 = scmp.lt.s32.totalorder %s388, 15
      %s390 = scalar_select %p389, %s388, 15
      %s391 = smul.addr %s390, 8
      %s392 = scalar_lea.vmem %s10, %s391
      %s393 = smul.u32 8, %s25
      %p394 = scmp.eq.s32.totalorder %s26, 0
      // Predicated region
      $region61: #{tpu_custom_call.1} parent=59 // pred_check
        %p395 = pneg %p394
      $region62: #{tpu_custom_call.1} parent=59 // pred_check_branch
        %397 = sbr.rel (%p395) target = $region64
      $region63: #{tpu_custom_call.1} parent=59 // pred_region
        %vm398 = vcmask 326656
        %399 = vst.msk [vmem:[%s392] sm:$0xff] %vm398, 0.0
        %400 = vst.msk [vmem:[%s392 + $0x8] sm:$0xff] %vm398, 0.0
        %401 = vst.msk [vmem:[%s392 + $0x10] sm:$0xff] %vm398, 0.0
        %402 = vst.msk [vmem:[%s392 + $0x18] sm:$0xff] %vm398, 0.0
        %403 = vst.msk [vmem:[%s392 + $0x20] sm:$0xff] %vm398, 0.0
        %404 = vst.msk [vmem:[%s392 + $0x28] sm:$0xff] %vm398, 0.0
        %405 = vst.msk [vmem:[%s392 + $0x30] sm:$0xff] %vm398, 0.0
        %406 = vst.msk [vmem:[%s392 + $0x38] sm:$0xff] %vm398, 0.0
      $region64: #{tpu_custom_call.1} parent=59 // pred_fallthru
        _
      %v407 = vld [vmem:[%s386] sm:$0xff]
      %v408 = vld [vmem:[%s386 + $0x8] sm:$0xff]
      %v409 = vld [vmem:[%s386 + $0x10] sm:$0xff]
      %v410 = vld [vmem:[%s386 + $0x18] sm:$0xff]
      %v411 = vld [vmem:[%s386 + $0x20] sm:$0xff]
      %v412 = vld [vmem:[%s386 + $0x28] sm:$0xff]
      %v413 = vld [vmem:[%s386 + $0x30] sm:$0xff]
      %v414 = vld [vmem:[%s386 + $0x38] sm:$0xff]
      %v415 = vld [vmem:[%s386 + $0x40] sm:$0xff]
      %v416 = vld [vmem:[%s386 + $0x48] sm:$0xff]
      %v417 = vld [vmem:[%s386 + $0x50] sm:$0xff]
      %v418 = vld [vmem:[%s386 + $0x58] sm:$0xff]
      %v419 = vld [vmem:[%s386 + $0x60] sm:$0xff]
      %v420 = vld [vmem:[%s386 + $0x68] sm:$0xff]
      %v421 = vld [vmem:[%s386 + $0x70] sm:$0xff]
      %v422 = vld [vmem:[%s386 + $0x78] sm:$0xff]
      %v423 = vld [vmem:[%s386 + $0x80] sm:$0xff]
      %v424 = vld [vmem:[%s386 + $0x88] sm:$0xff]
      %v425 = vld [vmem:[%s386 + $0x90] sm:$0xff]
      %v426 = vld [vmem:[%s386 + $0x98] sm:$0xff]
      %v427 = vld [vmem:[%s386 + $0xa0] sm:$0xff]
      %v428 = vld [vmem:[%s386 + $0xa8] sm:$0xff]
      %v429 = vld [vmem:[%s386 + $0xb0] sm:$0xff]
      %v430 = vld [vmem:[%s386 + $0xb8] sm:$0xff]
      %v431 = vld [vmem:[%s386 + $0xc0] sm:$0xff]
      %v432 = vld [vmem:[%s386 + $0xc8] sm:$0xff]
      %v433 = vld [vmem:[%s386 + $0xd0] sm:$0xff]
      %v434 = vld [vmem:[%s386 + $0xd8] sm:$0xff]
      %v435 = vld [vmem:[%s386 + $0xe0] sm:$0xff]
      %v436 = vld [vmem:[%s386 + $0xe8] sm:$0xff]
      %v437 = vld [vmem:[%s386 + $0xf0] sm:$0xff]
      %v438 = vld [vmem:[%s386 + $0xf8] sm:$0xff]
      %v439 = vld [vmem:[%s2] sm:$0xff]
      %v440 = vld [vmem:[%s2 + $0x8] sm:$0xff]
      %vm441 = vcmask 130048
      %v443 = vsel %vm441, %v407, 0
      %v446 = vsel %vm441, %v408, 0
      %v449 = vsel %vm441, %v409, 0
      %v452 = vsel %vm441, %v410, 0
      %v455 = vsel %vm441, %v411, 0
      %v458 = vsel %vm441, %v412, 0
      %v461 = vsel %vm441, %v413, 0
      %v464 = vsel %vm441, %v414, 0
      %v467 = vsel %vm441, %v415, 0
      %v470 = vsel %vm441, %v416, 0
      %v473 = vsel %vm441, %v417, 0
      %v476 = vsel %vm441, %v418, 0
      %v479 = vsel %vm441, %v419, 0
      %v482 = vsel %vm441, %v420, 0
      %v485 = vsel %vm441, %v421, 0
      %v488 = vsel %vm441, %v422, 0
      %v491 = vsel %vm441, %v423, 0
      %v494 = vsel %vm441, %v424, 0
      %v497 = vsel %vm441, %v425, 0
      %v500 = vsel %vm441, %v426, 0
      %v503 = vsel %vm441, %v427, 0
      %v506 = vsel %vm441, %v428, 0
      %v509 = vsel %vm441, %v429, 0
      %v512 = vsel %vm441, %v430, 0
      %v515 = vsel %vm441, %v431, 0
      %v518 = vsel %vm441, %v432, 0
      %v521 = vsel %vm441, %v433, 0
      %v524 = vsel %vm441, %v434, 0
      %v527 = vsel %vm441, %v435, 0
      %v530 = vsel %vm441, %v436, 0
      %v533 = vsel %vm441, %v437, 0
      %v536 = vsel %vm441, %v438, 0
      %538 = vmatpush.msra.mxu0 0.0
      %539 = vmatpush.msra.mxu0 0.0
      %540 = vmatpush.msra.mxu0 0.0
      %541 = vmatpush.msra.mxu0 0.0
      %542 = vmatpush.msra.mxu0 0.0
      %543 = vmatpush.msra.mxu0 0.0
      %544 = vmatpush.msra.mxu0 0.0
      %545 = vmatpush.msra.mxu0 0.0
      %546 = vmatpush.msra.mxu0 0.0
      %547 = vmatpush.msra.mxu0 0.0
      %548 = vmatpush.msra.mxu0 0.0
      %549 = vmatpush.msra.mxu0 0.0
      %550 = vmatpush.msra.mxu0 0.0
      %551 = vmatpush.msra.mxu0 0.0
      %552 = vmatpush.msra.mxu0 %v440
      %553 = vmatpush.msra.mxu0 %v439
      %554 = vmatmul.f32.gmra.mxu0 %v443
      %v555 = vpop.f32.mrf.mxu0
      %v556 = vadd.f32 0.0, %v555
      %557 = vmatmul.f32.gmra.mxu0 %v446
      %v558 = vpop.f32.mrf.mxu0
      %v559 = vadd.f32 0.0, %v558
      %560 = vmatmul.f32.gmra.mxu0 %v449
      %v561 = vpop.f32.mrf.mxu0
      %v562 = vadd.f32 0.0, %v561
      %563 = vmatmul.f32.gmra.mxu0 %v452
      %v564 = vpop.f32.mrf.mxu0
      %v565 = vadd.f32 0.0, %v564
      %566 = vmatmul.f32.gmra.mxu0 %v455
      %v567 = vpop.f32.mrf.mxu0
      %v568 = vadd.f32 0.0, %v567
      %569 = vmatmul.f32.gmra.mxu0 %v458
      %v570 = vpop.f32.mrf.mxu0
      %v571 = vadd.f32 0.0, %v570
      %572 = vmatmul.f32.gmra.mxu0 %v461
      %v573 = vpop.f32.mrf.mxu0
      %v574 = vadd.f32 0.0, %v573
      %575 = vmatmul.f32.gmra.mxu0 %v464
      %v576 = vpop.f32.mrf.mxu0
      %v577 = vadd.f32 0.0, %v576
      %578 = vmatmul.f32.gmra.mxu0 %v467
      %v579 = vpop.f32.mrf.mxu0
      %v580 = vadd.f32 0.0, %v579
      %581 = vmatmul.f32.gmra.mxu0 %v470
      %v582 = vpop.f32.mrf.mxu0
      %v583 = vadd.f32 0.0, %v582
      %584 = vmatmul.f32.gmra.mxu0 %v473
      %v585 = vpop.f32.mrf.mxu0
      %v586 = vadd.f32 0.0, %v585
      %587 = vmatmul.f32.gmra.mxu0 %v476
      %v588 = vpop.f32.mrf.mxu0
      %v589 = vadd.f32 0.0, %v588
      %590 = vmatmul.f32.gmra.mxu0 %v479
      %v591 = vpop.f32.mrf.mxu0
      %v592 = vadd.f32 0.0, %v591
      %593 = vmatmul.f32.gmra.mxu0 %v482
      %v594 = vpop.f32.mrf.mxu0
      %v595 = vadd.f32 0.0, %v594
      %596 = vmatmul.f32.gmra.mxu0 %v485
      %v597 = vpop.f32.mrf.mxu0
      %v598 = vadd.f32 0.0, %v597
      %599 = vmatmul.f32.gmra.mxu0 %v488
      %v600 = vpop.f32.mrf.mxu0
      %v601 = vadd.f32 0.0, %v600
      %602 = vmatmul.f32.gmra.mxu0 %v491
      %v603 = vpop.f32.mrf.mxu0
      %v604 = vadd.f32 0.0, %v603
      %605 = vmatmul.f32.gmra.mxu0 %v494
      %v606 = vpop.f32.mrf.mxu0
      %v607 = vadd.f32 0.0, %v606
      %608 = vmatmul.f32.gmra.mxu0 %v497
      %v609 = vpop.f32.mrf.mxu0
      %v610 = vadd.f32 0.0, %v609
      %611 = vmatmul.f32.gmra.mxu0 %v500
      %v612 = vpop.f32.mrf.mxu0
      %v613 = vadd.f32 0.0, %v612
      %614 = vmatmul.f32.gmra.mxu0 %v503
      %v615 = vpop.f32.mrf.mxu0
      %v616 = vadd.f32 0.0, %v615
      %617 = vmatmul.f32.gmra.mxu0 %v506
      %v618 = vpop.f32.mrf.mxu0
      %v619 = vadd.f32 0.0, %v618
      %620 = vmatmul.f32.gmra.mxu0 %v509
      %v621 = vpop.f32.mrf.mxu0
      %v622 = vadd.f32 0.0, %v621
      %623 = vmatmul.f32.gmra.mxu0 %v512
      %v624 = vpop.f32.mrf.mxu0
      %v625 = vadd.f32 0.0, %v624
      %626 = vmatmul.f32.gmra.mxu0 %v515
      %v627 = vpop.f32.mrf.mxu0
      %v628 = vadd.f32 0.0, %v627
      %629 = vmatmul.f32.gmra.mxu0 %v518
      %v630 = vpop.f32.mrf.mxu0
      %v631 = vadd.f32 0.0, %v630
      %632 = vmatmul.f32.gmra.mxu0 %v521
      %v633 = vpop.f32.mrf.mxu0
      %v634 = vadd.f32 0.0, %v633
      %635 = vmatmul.f32.gmra.mxu0 %v524
      %v636 = vpop.f32.mrf.mxu0
      %v637 = vadd.f32 0.0, %v636
      %638 = vmatmul.f32.gmra.mxu0 %v527
      %v639 = vpop.f32.mrf.mxu0
      %v640 = vadd.f32 0.0, %v639
      %641 = vmatmul.f32.gmra.mxu0 %v530
      %v642 = vpop.f32.mrf.mxu0
      %v643 = vadd.f32 0.0, %v642
      %644 = vmatmul.f32.gmra.mxu0 %v533
      %v645 = vpop.f32.mrf.mxu0
      %v646 = vadd.f32 0.0, %v645
      %647 = vmatmul.f32.gmra.mxu0 %v536
      %v648 = vpop.f32.mrf.mxu0
      %v649 = vadd.f32 0.0, %v648
      %650 = vdwg.mxu0
      %v651 = vld [vmem:[%s3] sm:$0x1]
      %v653 = vperm.slane %v651, 0
      %v655 = vmul.f32 %v556, %v653
      %v656 = vmul.f32 %v559, %v653
      %v657 = vmul.f32 %v562, %v653
      %v658 = vmul.f32 %v565, %v653
      %v659 = vmul.f32 %v568, %v653
      %v660 = vmul.f32 %v571, %v653
      %v661 = vmul.f32 %v574, %v653
      %v662 = vmul.f32 %v577, %v653
      %v663 = vmul.f32 %v580, %v653
      %v664 = vmul.f32 %v583, %v653
      %v665 = vmul.f32 %v586, %v653
      %v666 = vmul.f32 %v589, %v653
      %v667 = vmul.f32 %v592, %v653
      %v668 = vmul.f32 %v595, %v653
      %v669 = vmul.f32 %v598, %v653
      %v670 = vmul.f32 %v601, %v653
      %v671 = vmul.f32 %v604, %v653
      %v672 = vmul.f32 %v607, %v653
      %v673 = vmul.f32 %v610, %v653
      %v674 = vmul.f32 %v613, %v653
      %v675 = vmul.f32 %v616, %v653
      %v676 = vmul.f32 %v619, %v653
      %v677 = vmul.f32 %v622, %v653
      %v678 = vmul.f32 %v625, %v653
      %v679 = vmul.f32 %v628, %v653
      %v680 = vmul.f32 %v631, %v653
      %v681 = vmul.f32 %v634, %v653
      %v682 = vmul.f32 %v637, %v653
      %v683 = vmul.f32 %v640, %v653
      %v684 = vmul.f32 %v643, %v653
      %v685 = vmul.f32 %v646, %v653
      %v686 = vmul.f32 %v649, %v653
      %v687 = vld [vmem:[%s4] sm:$0x1]
      %v689 = vperm.slane %v687, 0
      %v691 = vadd.f32 %v655, %v689
      %v692 = vadd.f32 %v656, %v689
      %v693 = vadd.f32 %v657, %v689
      %v694 = vadd.f32 %v658, %v689
      %v695 = vadd.f32 %v659, %v689
      %v696 = vadd.f32 %v660, %v689
      %v697 = vadd.f32 %v661, %v689
      %v698 = vadd.f32 %v662, %v689
      %v699 = vadd.f32 %v663, %v689
      %v700 = vadd.f32 %v664, %v689
      %v701 = vadd.f32 %v665, %v689
      %v702 = vadd.f32 %v666, %v689
      %v703 = vadd.f32 %v667, %v689
      %v704 = vadd.f32 %v668, %v689
      %v705 = vadd.f32 %v669, %v689
      %v706 = vadd.f32 %v670, %v689
      %v707 = vadd.f32 %v671, %v689
      %v708 = vadd.f32 %v672, %v689
      %v709 = vadd.f32 %v673, %v689
      %v710 = vadd.f32 %v674, %v689
      %v711 = vadd.f32 %v675, %v689
      %v712 = vadd.f32 %v676, %v689
      %v713 = vadd.f32 %v677, %v689
      %v714 = vadd.f32 %v678, %v689
      %v715 = vadd.f32 %v679, %v689
      %v716 = vadd.f32 %v680, %v689
      %v717 = vadd.f32 %v681, %v689
      %v718 = vadd.f32 %v682, %v689
      %v719 = vadd.f32 %v683, %v689
      %v720 = vadd.f32 %v684, %v689
      %v721 = vadd.f32 %v685, %v689
      %v722 = vadd.f32 %v686, %v689
      %v723 = vmax.f32 %v691, 0.0
      %v724 = vmax.f32 %v692, 0.0
      %v725 = vmax.f32 %v693, 0.0
      %v726 = vmax.f32 %v694, 0.0
      %v727 = vmax.f32 %v695, 0.0
      %v728 = vmax.f32 %v696, 0.0
      %v729 = vmax.f32 %v697, 0.0
      %v730 = vmax.f32 %v698, 0.0
      %v731 = vmax.f32 %v699, 0.0
      %v732 = vmax.f32 %v700, 0.0
      %v733 = vmax.f32 %v701, 0.0
      %v734 = vmax.f32 %v702, 0.0
      %v735 = vmax.f32 %v703, 0.0
      %v736 = vmax.f32 %v704, 0.0
      %v737 = vmax.f32 %v705, 0.0
      %v738 = vmax.f32 %v706, 0.0
      %v739 = vmax.f32 %v707, 0.0
      %v740 = vmax.f32 %v708, 0.0
      %v741 = vmax.f32 %v709, 0.0
      %v742 = vmax.f32 %v710, 0.0
      %v743 = vmax.f32 %v711, 0.0
      %v744 = vmax.f32 %v712, 0.0
      %v745 = vmax.f32 %v713, 0.0
      %v746 = vmax.f32 %v714, 0.0
      %v747 = vmax.f32 %v715, 0.0
      %v748 = vmax.f32 %v716, 0.0
      %v749 = vmax.f32 %v717, 0.0
      %v750 = vmax.f32 %v718, 0.0
      %v751 = vmax.f32 %v719, 0.0
      %v752 = vmax.f32 %v720, 0.0
      %v753 = vmax.f32 %v721, 0.0
      %v754 = vmax.f32 %v722, 0.0
      %v755 = vld [vmem:[%s5] sm:$0x1]
      %v757 = vperm.slane %v755, 0
      %758 = vrot.lane.b32.xlu0 %v757, 32
      %v759 = vpop.permute.xlu0 %758
      %v761 = vadd.f32 %v556, %v759
      %v762 = vadd.f32 %v559, %v759
      %v763 = vadd.f32 %v562, %v759
      %v764 = vadd.f32 %v565, %v759
      %v765 = vadd.f32 %v568, %v759
      %v766 = vadd.f32 %v571, %v759
      %v767 = vadd.f32 %v574, %v759
      %v768 = vadd.f32 %v577, %v759
      %v769 = vadd.f32 %v580, %v759
      %v770 = vadd.f32 %v583, %v759
      %v771 = vadd.f32 %v586, %v759
      %v772 = vadd.f32 %v589, %v759
      %v773 = vadd.f32 %v592, %v759
      %v774 = vadd.f32 %v595, %v759
      %v775 = vadd.f32 %v598, %v759
      %v776 = vadd.f32 %v601, %v759
      %v777 = vadd.f32 %v604, %v759
      %v778 = vadd.f32 %v607, %v759
      %v779 = vadd.f32 %v610, %v759
      %v780 = vadd.f32 %v613, %v759
      %v781 = vadd.f32 %v616, %v759
      %v782 = vadd.f32 %v619, %v759
      %v783 = vadd.f32 %v622, %v759
      %v784 = vadd.f32 %v625, %v759
      %v785 = vadd.f32 %v628, %v759
      %v786 = vadd.f32 %v631, %v759
      %v787 = vadd.f32 %v634, %v759
      %v788 = vadd.f32 %v637, %v759
      %v789 = vadd.f32 %v640, %v759
      %v790 = vadd.f32 %v643, %v759
      %v791 = vadd.f32 %v646, %v759
      %v792 = vadd.f32 %v649, %v759
      %825 = vrot.lane.b32.xlu0 %v761, 96
      %v826 = vpop.permute.xlu0 %825
      %827 = vrot.lane.b32.xlu0 %v762, 96
      %v828 = vpop.permute.xlu0 %827
      %829 = vrot.lane.b32.xlu0 %v763, 96
      %v830 = vpop.permute.xlu0 %829
      %831 = vrot.lane.b32.xlu0 %v764, 96
      %v832 = vpop.permute.xlu0 %831
      %833 = vrot.lane.b32.xlu0 %v765, 96
      %v834 = vpop.permute.xlu0 %833
      %835 = vrot.lane.b32.xlu0 %v766, 96
      %v836 = vpop.permute.xlu0 %835
      %837 = vrot.lane.b32.xlu0 %v767, 96
      %v838 = vpop.permute.xlu0 %837
      %839 = vrot.lane.b32.xlu0 %v768, 96
      %v840 = vpop.permute.xlu0 %839
      %841 = vrot.lane.b32.xlu0 %v769, 96
      %v842 = vpop.permute.xlu0 %841
      %843 = vrot.lane.b32.xlu0 %v770, 96
      %v844 = vpop.permute.xlu0 %843
      %845 = vrot.lane.b32.xlu0 %v771, 96
      %v846 = vpop.permute.xlu0 %845
      %847 = vrot.lane.b32.xlu0 %v772, 96
      %v848 = vpop.permute.xlu0 %847
      %849 = vrot.lane.b32.xlu0 %v773, 96
      %v850 = vpop.permute.xlu0 %849
      %851 = vrot.lane.b32.xlu0 %v774, 96
      %v852 = vpop.permute.xlu0 %851
      %853 = vrot.lane.b32.xlu0 %v775, 96
      %v854 = vpop.permute.xlu0 %853
      %855 = vrot.lane.b32.xlu0 %v776, 96
      %v856 = vpop.permute.xlu0 %855
      %857 = vrot.lane.b32.xlu0 %v777, 96
      %v858 = vpop.permute.xlu0 %857
      %859 = vrot.lane.b32.xlu0 %v778, 96
      %v860 = vpop.permute.xlu0 %859
      %861 = vrot.lane.b32.xlu0 %v779, 96
      %v862 = vpop.permute.xlu0 %861
      %863 = vrot.lane.b32.xlu0 %v780, 96
      %v864 = vpop.permute.xlu0 %863
      %865 = vrot.lane.b32.xlu0 %v781, 96
      %v866 = vpop.permute.xlu0 %865
      %867 = vrot.lane.b32.xlu0 %v782, 96
      %v868 = vpop.permute.xlu0 %867
      %869 = vrot.lane.b32.xlu0 %v783, 96
      %v870 = vpop.permute.xlu0 %869
      %871 = vrot.lane.b32.xlu0 %v784, 96
      %v872 = vpop.permute.xlu0 %871
      %873 = vrot.lane.b32.xlu0 %v785, 96
      %v874 = vpop.permute.xlu0 %873
      %875 = vrot.lane.b32.xlu0 %v786, 96
      %v876 = vpop.permute.xlu0 %875
      %877 = vrot.lane.b32.xlu0 %v787, 96
      %v878 = vpop.permute.xlu0 %877
      %879 = vrot.lane.b32.xlu0 %v788, 96
      %v880 = vpop.permute.xlu0 %879
      %881 = vrot.lane.b32.xlu0 %v789, 96
      %v882 = vpop.permute.xlu0 %881
      %883 = vrot.lane.b32.xlu0 %v790, 96
      %v884 = vpop.permute.xlu0 %883
      %885 = vrot.lane.b32.xlu0 %v791, 96
      %v886 = vpop.permute.xlu0 %885
      %887 = vrot.lane.b32.xlu0 %v792, 96
      %v888 = vpop.permute.xlu0 %887
      %vm921 = vcmask 261120
      %v922 = vsel %vm921, %v826, 0.0
      %923 = vadd.xlane.f32.xlu0 %v922
      %v924 = vpop.xlane.xlu0 %923
      %v925 = vsel %vm921, %v828, 0.0
      %926 = vadd.xlane.f32.xlu0 %v925
      %v927 = vpop.xlane.xlu0 %926
      %v928 = vsel %vm921, %v830, 0.0
      %929 = vadd.xlane.f32.xlu0 %v928
      %v930 = vpop.xlane.xlu0 %929
      %v931 = vsel %vm921, %v832, 0.0
      %932 = vadd.xlane.f32.xlu0 %v931
      %v933 = vpop.xlane.xlu0 %932
      %v934 = vsel %vm921, %v834, 0.0
      %935 = vadd.xlane.f32.xlu0 %v934
      %v936 = vpop.xlane.xlu0 %935
      %v937 = vsel %vm921, %v836, 0.0
      %938 = vadd.xlane.f32.xlu0 %v937
      %v939 = vpop.xlane.xlu0 %938
      %v940 = vsel %vm921, %v838, 0.0
      %941 = vadd.xlane.f32.xlu0 %v940
      %v942 = vpop.xlane.xlu0 %941
      %v943 = vsel %vm921, %v840, 0.0
      %944 = vadd.xlane.f32.xlu0 %v943
      %v945 = vpop.xlane.xlu0 %944
      %v946 = vsel %vm921, %v842, 0.0
      %947 = vadd.xlane.f32.xlu0 %v946
      %v948 = vpop.xlane.xlu0 %947
      %v949 = vsel %vm921, %v844, 0.0
      %950 = vadd.xlane.f32.xlu0 %v949
      %v951 = vpop.xlane.xlu0 %950
      %v952 = vsel %vm921, %v846, 0.0
      %953 = vadd.xlane.f32.xlu0 %v952
      %v954 = vpop.xlane.xlu0 %953
      %v955 = vsel %vm921, %v848, 0.0
      %956 = vadd.xlane.f32.xlu0 %v955
      %v957 = vpop.xlane.xlu0 %956
      %v958 = vsel %vm921, %v850, 0.0
      %959 = vadd.xlane.f32.xlu0 %v958
      %v960 = vpop.xlane.xlu0 %959
      %v961 = vsel %vm921, %v852, 0.0
      %962 = vadd.xlane.f32.xlu0 %v961
      %v963 = vpop.xlane.xlu0 %962
      %v964 = vsel %vm921, %v854, 0.0
      %965 = vadd.xlane.f32.xlu0 %v964
      %v966 = vpop.xlane.xlu0 %965
      %v967 = vsel %vm921, %v856, 0.0
      %968 = vadd.xlane.f32.xlu0 %v967
      %v969 = vpop.xlane.xlu0 %968
      %v970 = vsel %vm921, %v858, 0.0
      %971 = vadd.xlane.f32.xlu0 %v970
      %v972 = vpop.xlane.xlu0 %971
      %v973 = vsel %vm921, %v860, 0.0
      %974 = vadd.xlane.f32.xlu0 %v973
      %v975 = vpop.xlane.xlu0 %974
      %v976 = vsel %vm921, %v862, 0.0
      %977 = vadd.xlane.f32.xlu0 %v976
      %v978 = vpop.xlane.xlu0 %977
      %v979 = vsel %vm921, %v864, 0.0
      %980 = vadd.xlane.f32.xlu0 %v979
      %v981 = vpop.xlane.xlu0 %980
      %v982 = vsel %vm921, %v866, 0.0
      %983 = vadd.xlane.f32.xlu0 %v982
      %v984 = vpop.xlane.xlu0 %983
      %v985 = vsel %vm921, %v868, 0.0
      %986 = vadd.xlane.f32.xlu0 %v985
      %v987 = vpop.xlane.xlu0 %986
      %v988 = vsel %vm921, %v870, 0.0
      %989 = vadd.xlane.f32.xlu0 %v988
      %v990 = vpop.xlane.xlu0 %989
      %v991 = vsel %vm921, %v872, 0.0
      %992 = vadd.xlane.f32.xlu0 %v991
      %v993 = vpop.xlane.xlu0 %992
      %v994 = vsel %vm921, %v874, 0.0
      %995 = vadd.xlane.f32.xlu0 %v994
      %v996 = vpop.xlane.xlu0 %995
      %v997 = vsel %vm921, %v876, 0.0
      %998 = vadd.xlane.f32.xlu0 %v997
      %v999 = vpop.xlane.xlu0 %998
      %v1000 = vsel %vm921, %v878, 0.0
      %1001 = vadd.xlane.f32.xlu0 %v1000
      %v1002 = vpop.xlane.xlu0 %1001
      %v1003 = vsel %vm921, %v880, 0.0
      %1004 = vadd.xlane.f32.xlu0 %v1003
      %v1005 = vpop.xlane.xlu0 %1004
      %v1006 = vsel %vm921, %v882, 0.0
      %1007 = vadd.xlane.f32.xlu0 %v1006
      %v1008 = vpop.xlane.xlu0 %1007
      %v1009 = vsel %vm921, %v884, 0.0
      %1010 = vadd.xlane.f32.xlu0 %v1009
      %v1011 = vpop.xlane.xlu0 %1010
      %v1012 = vsel %vm921, %v886, 0.0
      %1013 = vadd.xlane.f32.xlu0 %v1012
      %v1014 = vpop.xlane.xlu0 %1013
      %v1015 = vsel %vm921, %v888, 0.0
      %1016 = vadd.xlane.f32.xlu0 %v1015
      %v1017 = vpop.xlane.xlu0 %1016
      %v1018 = vrcp.pop 32.0
      %v1019 = vmul.f32 32.0, %v1018
      %v1020 = vsub.f32 1.0, %v1019
      %v1021 = vmul.f32 %v1018, %v1020
      %v1022 = vadd.f32 %v1018, %v1021
      %vm1023 = vweird.f32 %v1018
      %v1024 = vsel %vm1023, %v1018, %v1022
      %v1025 = vmul.f32 %v924, %v1024
      %v1026 = vmul.f32 %v927, %v1024
      %v1027 = vmul.f32 %v930, %v1024
      %v1028 = vmul.f32 %v933, %v1024
      %v1029 = vmul.f32 %v936, %v1024
      %v1030 = vmul.f32 %v939, %v1024
      %v1031 = vmul.f32 %v942, %v1024
      %v1032 = vmul.f32 %v945, %v1024
      %v1033 = vmul.f32 %v948, %v1024
      %v1034 = vmul.f32 %v951, %v1024
      %v1035 = vmul.f32 %v954, %v1024
      %v1036 = vmul.f32 %v957, %v1024
      %v1037 = vmul.f32 %v960, %v1024
      %v1038 = vmul.f32 %v963, %v1024
      %v1039 = vmul.f32 %v966, %v1024
      %v1040 = vmul.f32 %v969, %v1024
      %v1041 = vmul.f32 %v972, %v1024
      %v1042 = vmul.f32 %v975, %v1024
      %v1043 = vmul.f32 %v978, %v1024
      %v1044 = vmul.f32 %v981, %v1024
      %v1045 = vmul.f32 %v984, %v1024
      %v1046 = vmul.f32 %v987, %v1024
      %v1047 = vmul.f32 %v990, %v1024
      %v1048 = vmul.f32 %v993, %v1024
      %v1049 = vmul.f32 %v996, %v1024
      %v1050 = vmul.f32 %v999, %v1024
      %v1051 = vmul.f32 %v1002, %v1024
      %v1052 = vmul.f32 %v1005, %v1024
      %v1053 = vmul.f32 %v1008, %v1024
      %v1054 = vmul.f32 %v1011, %v1024
      %v1055 = vmul.f32 %v1014, %v1024
      %v1056 = vmul.f32 %v1017, %v1024
      %v1057 = vsub.f32 %v761, %v1025
      %v1058 = vsub.f32 %v762, %v1026
      %v1059 = vsub.f32 %v763, %v1027
      %v1060 = vsub.f32 %v764, %v1028
      %v1061 = vsub.f32 %v765, %v1029
      %v1062 = vsub.f32 %v766, %v1030
      %v1063 = vsub.f32 %v767, %v1031
      %v1064 = vsub.f32 %v768, %v1032
      %v1065 = vsub.f32 %v769, %v1033
      %v1066 = vsub.f32 %v770, %v1034
      %v1067 = vsub.f32 %v771, %v1035
      %v1068 = vsub.f32 %v772, %v1036
      %v1069 = vsub.f32 %v773, %v1037
      %v1070 = vsub.f32 %v774, %v1038
      %v1071 = vsub.f32 %v775, %v1039
      %v1072 = vsub.f32 %v776, %v1040
      %v1073 = vsub.f32 %v777, %v1041
      %v1074 = vsub.f32 %v778, %v1042
      %v1075 = vsub.f32 %v779, %v1043
      %v1076 = vsub.f32 %v780, %v1044
      %v1077 = vsub.f32 %v781, %v1045
      %v1078 = vsub.f32 %v782, %v1046
      %v1079 = vsub.f32 %v783, %v1047
      %v1080 = vsub.f32 %v784, %v1048
      %v1081 = vsub.f32 %v785, %v1049
      %v1082 = vsub.f32 %v786, %v1050
      %v1083 = vsub.f32 %v787, %v1051
      %v1084 = vsub.f32 %v788, %v1052
      %v1085 = vsub.f32 %v789, %v1053
      %v1086 = vsub.f32 %v790, %v1054
      %v1087 = vsub.f32 %v791, %v1055
      %v1088 = vsub.f32 %v792, %v1056
      %v1089 = vmul.f32 %v1057, %v1057
      %v1090 = vmul.f32 %v1058, %v1058
      %v1091 = vmul.f32 %v1059, %v1059
      %v1092 = vmul.f32 %v1060, %v1060
      %v1093 = vmul.f32 %v1061, %v1061
      %v1094 = vmul.f32 %v1062, %v1062
      %v1095 = vmul.f32 %v1063, %v1063
      %v1096 = vmul.f32 %v1064, %v1064
      %v1097 = vmul.f32 %v1065, %v1065
      %v1098 = vmul.f32 %v1066, %v1066
      %v1099 = vmul.f32 %v1067, %v1067
      %v1100 = vmul.f32 %v1068, %v1068
      %v1101 = vmul.f32 %v1069, %v1069
      %v1102 = vmul.f32 %v1070, %v1070
      %v1103 = vmul.f32 %v1071, %v1071
      %v1104 = vmul.f32 %v1072, %v1072
      %v1105 = vmul.f32 %v1073, %v1073
      %v1106 = vmul.f32 %v1074, %v1074
      %v1107 = vmul.f32 %v1075, %v1075
      %v1108 = vmul.f32 %v1076, %v1076
      %v1109 = vmul.f32 %v1077, %v1077
      %v1110 = vmul.f32 %v1078, %v1078
      %v1111 = vmul.f32 %v1079, %v1079
      %v1112 = vmul.f32 %v1080, %v1080
      %v1113 = vmul.f32 %v1081, %v1081
      %v1114 = vmul.f32 %v1082, %v1082
      %v1115 = vmul.f32 %v1083, %v1083
      %v1116 = vmul.f32 %v1084, %v1084
      %v1117 = vmul.f32 %v1085, %v1085
      %v1118 = vmul.f32 %v1086, %v1086
      %v1119 = vmul.f32 %v1087, %v1087
      %v1120 = vmul.f32 %v1088, %v1088
      %1153 = vrot.lane.b32.xlu0 %v1089, 96
      %v1154 = vpop.permute.xlu0 %1153
      %1155 = vrot.lane.b32.xlu0 %v1090, 96
      %v1156 = vpop.permute.xlu0 %1155
      %1157 = vrot.lane.b32.xlu0 %v1091, 96
      %v1158 = vpop.permute.xlu0 %1157
      %1159 = vrot.lane.b32.xlu0 %v1092, 96
      %v1160 = vpop.permute.xlu0 %1159
      %1161 = vrot.lane.b32.xlu0 %v1093, 96
      %v1162 = vpop.permute.xlu0 %1161
      %1163 = vrot.lane.b32.xlu0 %v1094, 96
      %v1164 = vpop.permute.xlu0 %1163
      %1165 = vrot.lane.b32.xlu0 %v1095, 96
      %v1166 = vpop.permute.xlu0 %1165
      %1167 = vrot.lane.b32.xlu0 %v1096, 96
      %v1168 = vpop.permute.xlu0 %1167
      %1169 = vrot.lane.b32.xlu0 %v1097, 96
      %v1170 = vpop.permute.xlu0 %1169
      %1171 = vrot.lane.b32.xlu0 %v1098, 96
      %v1172 = vpop.permute.xlu0 %1171
      %1173 = vrot.lane.b32.xlu0 %v1099, 96
      %v1174 = vpop.permute.xlu0 %1173
      %1175 = vrot.lane.b32.xlu0 %v1100, 96
      %v1176 = vpop.permute.xlu0 %1175
      %1177 = vrot.lane.b32.xlu0 %v1101, 96
      %v1178 = vpop.permute.xlu0 %1177
      %1179 = vrot.lane.b32.xlu0 %v1102, 96
      %v1180 = vpop.permute.xlu0 %1179
      %1181 = vrot.lane.b32.xlu0 %v1103, 96
      %v1182 = vpop.permute.xlu0 %1181
      %1183 = vrot.lane.b32.xlu0 %v1104, 96
      %v1184 = vpop.permute.xlu0 %1183
      %1185 = vrot.lane.b32.xlu0 %v1105, 96
      %v1186 = vpop.permute.xlu0 %1185
      %1187 = vrot.lane.b32.xlu0 %v1106, 96
      %v1188 = vpop.permute.xlu0 %1187
      %1189 = vrot.lane.b32.xlu0 %v1107, 96
      %v1190 = vpop.permute.xlu0 %1189
      %1191 = vrot.lane.b32.xlu0 %v1108, 96
      %v1192 = vpop.permute.xlu0 %1191
      %1193 = vrot.lane.b32.xlu0 %v1109, 96
      %v1194 = vpop.permute.xlu0 %1193
      %1195 = vrot.lane.b32.xlu0 %v1110, 96
      %v1196 = vpop.permute.xlu0 %1195
      %1197 = vrot.lane.b32.xlu0 %v1111, 96
      %v1198 = vpop.permute.xlu0 %1197
      %1199 = vrot.lane.b32.xlu0 %v1112, 96
      %v1200 = vpop.permute.xlu0 %1199
      %1201 = vrot.lane.b32.xlu0 %v1113, 96
      %v1202 = vpop.permute.xlu0 %1201
      %1203 = vrot.lane.b32.xlu0 %v1114, 96
      %v1204 = vpop.permute.xlu0 %1203
      %1205 = vrot.lane.b32.xlu0 %v1115, 96
      %v1206 = vpop.permute.xlu0 %1205
      %1207 = vrot.lane.b32.xlu0 %v1116, 96
      %v1208 = vpop.permute.xlu0 %1207
      %1209 = vrot.lane.b32.xlu0 %v1117, 96
      %v1210 = vpop.permute.xlu0 %1209
      %1211 = vrot.lane.b32.xlu0 %v1118, 96
      %v1212 = vpop.permute.xlu0 %1211
      %1213 = vrot.lane.b32.xlu0 %v1119, 96
      %v1214 = vpop.permute.xlu0 %1213
      %1215 = vrot.lane.b32.xlu0 %v1120, 96
      %v1216 = vpop.permute.xlu0 %1215
      %v1249 = vsel %vm921, %v1154, 0.0
      %1250 = vadd.xlane.f32.xlu0 %v1249
      %v1251 = vpop.xlane.xlu0 %1250
      %v1252 = vsel %vm921, %v1156, 0.0
      %1253 = vadd.xlane.f32.xlu0 %v1252
      %v1254 = vpop.xlane.xlu0 %1253
      %v1255 = vsel %vm921, %v1158, 0.0
      %1256 = vadd.xlane.f32.xlu0 %v1255
      %v1257 = vpop.xlane.xlu0 %1256
      %v1258 = vsel %vm921, %v1160, 0.0
      %1259 = vadd.xlane.f32.xlu0 %v1258
      %v1260 = vpop.xlane.xlu0 %1259
      %v1261 = vsel %vm921, %v1162, 0.0
      %1262 = vadd.xlane.f32.xlu0 %v1261
      %v1263 = vpop.xlane.xlu0 %1262
      %v1264 = vsel %vm921, %v1164, 0.0
      %1265 = vadd.xlane.f32.xlu0 %v1264
      %v1266 = vpop.xlane.xlu0 %1265
      %v1267 = vsel %vm921, %v1166, 0.0
      %1268 = vadd.xlane.f32.xlu0 %v1267
      %v1269 = vpop.xlane.xlu0 %1268
      %v1270 = vsel %vm921, %v1168, 0.0
      %1271 = vadd.xlane.f32.xlu0 %v1270
      %v1272 = vpop.xlane.xlu0 %1271
      %v1273 = vsel %vm921, %v1170, 0.0
      %1274 = vadd.xlane.f32.xlu0 %v1273
      %v1275 = vpop.xlane.xlu0 %1274
      %v1276 = vsel %vm921, %v1172, 0.0
      %1277 = vadd.xlane.f32.xlu0 %v1276
      %v1278 = vpop.xlane.xlu0 %1277
      %v1279 = vsel %vm921, %v1174, 0.0
      %1280 = vadd.xlane.f32.xlu0 %v1279
      %v1281 = vpop.xlane.xlu0 %1280
      %v1282 = vsel %vm921, %v1176, 0.0
      %1283 = vadd.xlane.f32.xlu0 %v1282
      %v1284 = vpop.xlane.xlu0 %1283
      %v1285 = vsel %vm921, %v1178, 0.0
      %1286 = vadd.xlane.f32.xlu0 %v1285
      %v1287 = vpop.xlane.xlu0 %1286
      %v1288 = vsel %vm921, %v1180, 0.0
      %1289 = vadd.xlane.f32.xlu0 %v1288
      %v1290 = vpop.xlane.xlu0 %1289
      %v1291 = vsel %vm921, %v1182, 0.0
      %1292 = vadd.xlane.f32.xlu0 %v1291
      %v1293 = vpop.xlane.xlu0 %1292
      %v1294 = vsel %vm921, %v1184, 0.0
      %1295 = vadd.xlane.f32.xlu0 %v1294
      %v1296 = vpop.xlane.xlu0 %1295
      %v1297 = vsel %vm921, %v1186, 0.0
      %1298 = vadd.xlane.f32.xlu0 %v1297
      %v1299 = vpop.xlane.xlu0 %1298
      %v1300 = vsel %vm921, %v1188, 0.0
      %1301 = vadd.xlane.f32.xlu0 %v1300
      %v1302 = vpop.xlane.xlu0 %1301
      %v1303 = vsel %vm921, %v1190, 0.0
      %1304 = vadd.xlane.f32.xlu0 %v1303
      %v1305 = vpop.xlane.xlu0 %1304
      %v1306 = vsel %vm921, %v1192, 0.0
      %1307 = vadd.xlane.f32.xlu0 %v1306
      %v1308 = vpop.xlane.xlu0 %1307
      %v1309 = vsel %vm921, %v1194, 0.0
      %1310 = vadd.xlane.f32.xlu0 %v1309
      %v1311 = vpop.xlane.xlu0 %1310
      %v1312 = vsel %vm921, %v1196, 0.0
      %1313 = vadd.xlane.f32.xlu0 %v1312
      %v1314 = vpop.xlane.xlu0 %1313
      %v1315 = vsel %vm921, %v1198, 0.0
      %1316 = vadd.xlane.f32.xlu0 %v1315
      %v1317 = vpop.xlane.xlu0 %1316
      %v1318 = vsel %vm921, %v1200, 0.0
      %1319 = vadd.xlane.f32.xlu0 %v1318
      %v1320 = vpop.xlane.xlu0 %1319
      %v1321 = vsel %vm921, %v1202, 0.0
      %1322 = vadd.xlane.f32.xlu0 %v1321
      %v1323 = vpop.xlane.xlu0 %1322
      %v1324 = vsel %vm921, %v1204, 0.0
      %1325 = vadd.xlane.f32.xlu0 %v1324
      %v1326 = vpop.xlane.xlu0 %1325
      %v1327 = vsel %vm921, %v1206, 0.0
      %1328 = vadd.xlane.f32.xlu0 %v1327
      %v1329 = vpop.xlane.xlu0 %1328
      %v1330 = vsel %vm921, %v1208, 0.0
      %1331 = vadd.xlane.f32.xlu0 %v1330
      %v1332 = vpop.xlane.xlu0 %1331
      %v1333 = vsel %vm921, %v1210, 0.0
      %1334 = vadd.xlane.f32.xlu0 %v1333
      %v1335 = vpop.xlane.xlu0 %1334
      %v1336 = vsel %vm921, %v1212, 0.0
      %1337 = vadd.xlane.f32.xlu0 %v1336
      %v1338 = vpop.xlane.xlu0 %1337
      %v1339 = vsel %vm921, %v1214, 0.0
      %1340 = vadd.xlane.f32.xlu0 %v1339
      %v1341 = vpop.xlane.xlu0 %1340
      %v1342 = vsel %vm921, %v1216, 0.0
      %1343 = vadd.xlane.f32.xlu0 %v1342
      %v1344 = vpop.xlane.xlu0 %1343
      %v1345 = vmul.f32 %v1251, %v1024
      %v1346 = vmul.f32 %v1254, %v1024
      %v1347 = vmul.f32 %v1257, %v1024
      %v1348 = vmul.f32 %v1260, %v1024
      %v1349 = vmul.f32 %v1263, %v1024
      %v1350 = vmul.f32 %v1266, %v1024
      %v1351 = vmul.f32 %v1269, %v1024
      %v1352 = vmul.f32 %v1272, %v1024
      %v1353 = vmul.f32 %v1275, %v1024
      %v1354 = vmul.f32 %v1278, %v1024
      %v1355 = vmul.f32 %v1281, %v1024
      %v1356 = vmul.f32 %v1284, %v1024
      %v1357 = vmul.f32 %v1287, %v1024
      %v1358 = vmul.f32 %v1290, %v1024
      %v1359 = vmul.f32 %v1293, %v1024
      %v1360 = vmul.f32 %v1296, %v1024
      %v1361 = vmul.f32 %v1299, %v1024
      %v1362 = vmul.f32 %v1302, %v1024
      %v1363 = vmul.f32 %v1305, %v1024
      %v1364 = vmul.f32 %v1308, %v1024
      %v1365 = vmul.f32 %v1311, %v1024
      %v1366 = vmul.f32 %v1314, %v1024
      %v1367 = vmul.f32 %v1317, %v1024
      %v1368 = vmul.f32 %v1320, %v1024
      %v1369 = vmul.f32 %v1323, %v1024
      %v1370 = vmul.f32 %v1326, %v1024
      %v1371 = vmul.f32 %v1329, %v1024
      %v1372 = vmul.f32 %v1332, %v1024
      %v1373 = vmul.f32 %v1335, %v1024
      %v1374 = vmul.f32 %v1338, %v1024
      %v1375 = vmul.f32 %v1341, %v1024
      %v1376 = vmul.f32 %v1344, %v1024
      %v1377 = vadd.f32 %v1345, 1e-05
      %v1378 = vadd.f32 %v1346, 1e-05
      %v1379 = vadd.f32 %v1347, 1e-05
      %v1380 = vadd.f32 %v1348, 1e-05
      %v1381 = vadd.f32 %v1349, 1e-05
      %v1382 = vadd.f32 %v1350, 1e-05
      %v1383 = vadd.f32 %v1351, 1e-05
      %v1384 = vadd.f32 %v1352, 1e-05
      %v1385 = vadd.f32 %v1353, 1e-05
      %v1386 = vadd.f32 %v1354, 1e-05
      %v1387 = vadd.f32 %v1355, 1e-05
      %v1388 = vadd.f32 %v1356, 1e-05
      %v1389 = vadd.f32 %v1357, 1e-05
      %v1390 = vadd.f32 %v1358, 1e-05
      %v1391 = vadd.f32 %v1359, 1e-05
      %v1392 = vadd.f32 %v1360, 1e-05
      %v1393 = vadd.f32 %v1361, 1e-05
      %v1394 = vadd.f32 %v1362, 1e-05
      %v1395 = vadd.f32 %v1363, 1e-05
      %v1396 = vadd.f32 %v1364, 1e-05
      %v1397 = vadd.f32 %v1365, 1e-05
      %v1398 = vadd.f32 %v1366, 1e-05
      %v1399 = vadd.f32 %v1367, 1e-05
      %v1400 = vadd.f32 %v1368, 1e-05
      %v1401 = vadd.f32 %v1369, 1e-05
      %v1402 = vadd.f32 %v1370, 1e-05
      %v1403 = vadd.f32 %v1371, 1e-05
      %v1404 = vadd.f32 %v1372, 1e-05
      %v1405 = vadd.f32 %v1373, 1e-05
      %v1406 = vadd.f32 %v1374, 1e-05
      %v1407 = vadd.f32 %v1375, 1e-05
      %v1408 = vadd.f32 %v1376, 1e-05
      %v1409 = vrsqrt.pop %v1377
      %v1410 = vmul.f32 %v1409, %v1377
      %v1411 = vmul.f32 %v1410, %v1409
      %v1412 = vmul.f32 0.5, %v1411
      %v1413 = vsub.f32 1.5, %v1412
      %v1414 = vmul.f32 %v1409, %v1413
      %vm1415 = vweird.f32 %v1377
      %vm1416 = vweird.f32 %v1409
      %vm1417 = vmor %vm1415, %vm1416
      %v1418 = vsel %vm1417, %v1409, %v1414
      %v1419 = vrsqrt.pop %v1378
      %v1420 = vmul.f32 %v1419, %v1378
      %v1421 = vmul.f32 %v1420, %v1419
      %v1422 = vmul.f32 0.5, %v1421
      %v1423 = vsub.f32 1.5, %v1422
      %v1424 = vmul.f32 %v1419, %v1423
      %vm1425 = vweird.f32 %v1378
      %vm1426 = vweird.f32 %v1419
      %vm1427 = vmor %vm1425, %vm1426
      %v1428 = vsel %vm1427, %v1419, %v1424
      %v1429 = vrsqrt.pop %v1379
      %v1430 = vmul.f32 %v1429, %v1379
      %v1431 = vmul.f32 %v1430, %v1429
      %v1432 = vmul.f32 0.5, %v1431
      %v1433 = vsub.f32 1.5, %v1432
      %v1434 = vmul.f32 %v1429, %v1433
      %vm1435 = vweird.f32 %v1379
      %vm1436 = vweird.f32 %v1429
      %vm1437 = vmor %vm1435, %vm1436
      %v1438 = vsel %vm1437, %v1429, %v1434
      %v1439 = vrsqrt.pop %v1380
      %v1440 = vmul.f32 %v1439, %v1380
      %v1441 = vmul.f32 %v1440, %v1439
      %v1442 = vmul.f32 0.5, %v1441
      %v1443 = vsub.f32 1.5, %v1442
      %v1444 = vmul.f32 %v1439, %v1443
      %vm1445 = vweird.f32 %v1380
      %vm1446 = vweird.f32 %v1439
      %vm1447 = vmor %vm1445, %vm1446
      %v1448 = vsel %vm1447, %v1439, %v1444
      %v1449 = vrsqrt.pop %v1381
      %v1450 = vmul.f32 %v1449, %v1381
      %v1451 = vmul.f32 %v1450, %v1449
      %v1452 = vmul.f32 0.5, %v1451
      %v1453 = vsub.f32 1.5, %v1452
      %v1454 = vmul.f32 %v1449, %v1453
      %vm1455 = vweird.f32 %v1381
      %vm1456 = vweird.f32 %v1449
      %vm1457 = vmor %vm1455, %vm1456
      %v1458 = vsel %vm1457, %v1449, %v1454
      %v1459 = vrsqrt.pop %v1382
      %v1460 = vmul.f32 %v1459, %v1382
      %v1461 = vmul.f32 %v1460, %v1459
      %v1462 = vmul.f32 0.5, %v1461
      %v1463 = vsub.f32 1.5, %v1462
      %v1464 = vmul.f32 %v1459, %v1463
      %vm1465 = vweird.f32 %v1382
      %vm1466 = vweird.f32 %v1459
      %vm1467 = vmor %vm1465, %vm1466
      %v1468 = vsel %vm1467, %v1459, %v1464
      %v1469 = vrsqrt.pop %v1383
      %v1470 = vmul.f32 %v1469, %v1383
      %v1471 = vmul.f32 %v1470, %v1469
      %v1472 = vmul.f32 0.5, %v1471
      %v1473 = vsub.f32 1.5, %v1472
      %v1474 = vmul.f32 %v1469, %v1473
      %vm1475 = vweird.f32 %v1383
      %vm1476 = vweird.f32 %v1469
      %vm1477 = vmor %vm1475, %vm1476
      %v1478 = vsel %vm1477, %v1469, %v1474
      %v1479 = vrsqrt.pop %v1384
      %v1480 = vmul.f32 %v1479, %v1384
      %v1481 = vmul.f32 %v1480, %v1479
      %v1482 = vmul.f32 0.5, %v1481
      %v1483 = vsub.f32 1.5, %v1482
      %v1484 = vmul.f32 %v1479, %v1483
      %vm1485 = vweird.f32 %v1384
      %vm1486 = vweird.f32 %v1479
      %vm1487 = vmor %vm1485, %vm1486
      %v1488 = vsel %vm1487, %v1479, %v1484
      %v1489 = vrsqrt.pop %v1385
      %v1490 = vmul.f32 %v1489, %v1385
      %v1491 = vmul.f32 %v1490, %v1489
      %v1492 = vmul.f32 0.5, %v1491
      %v1493 = vsub.f32 1.5, %v1492
      %v1494 = vmul.f32 %v1489, %v1493
      %vm1495 = vweird.f32 %v1385
      %vm1496 = vweird.f32 %v1489
      %vm1497 = vmor %vm1495, %vm1496
      %v1498 = vsel %vm1497, %v1489, %v1494
      %v1499 = vrsqrt.pop %v1386
      %v1500 = vmul.f32 %v1499, %v1386
      %v1501 = vmul.f32 %v1500, %v1499
      %v1502 = vmul.f32 0.5, %v1501
      %v1503 = vsub.f32 1.5, %v1502
      %v1504 = vmul.f32 %v1499, %v1503
      %vm1505 = vweird.f32 %v1386
      %vm1506 = vweird.f32 %v1499
      %vm1507 = vmor %vm1505, %vm1506
      %v1508 = vsel %vm1507, %v1499, %v1504
      %v1509 = vrsqrt.pop %v1387
      %v1510 = vmul.f32 %v1509, %v1387
      %v1511 = vmul.f32 %v1510, %v1509
      %v1512 = vmul.f32 0.5, %v1511
      %v1513 = vsub.f32 1.5, %v1512
      %v1514 = vmul.f32 %v1509, %v1513
      %vm1515 = vweird.f32 %v1387
      %vm1516 = vweird.f32 %v1509
      %vm1517 = vmor %vm1515, %vm1516
      %v1518 = vsel %vm1517, %v1509, %v1514
      %v1519 = vrsqrt.pop %v1388
      %v1520 = vmul.f32 %v1519, %v1388
      %v1521 = vmul.f32 %v1520, %v1519
      %v1522 = vmul.f32 0.5, %v1521
      %v1523 = vsub.f32 1.5, %v1522
      %v1524 = vmul.f32 %v1519, %v1523
      %vm1525 = vweird.f32 %v1388
      %vm1526 = vweird.f32 %v1519
      %vm1527 = vmor %vm1525, %vm1526
      %v1528 = vsel %vm1527, %v1519, %v1524
      %v1529 = vrsqrt.pop %v1389
      %v1530 = vmul.f32 %v1529, %v1389
      %v1531 = vmul.f32 %v1530, %v1529
      %v1532 = vmul.f32 0.5, %v1531
      %v1533 = vsub.f32 1.5, %v1532
      %v1534 = vmul.f32 %v1529, %v1533
      %vm1535 = vweird.f32 %v1389
      %vm1536 = vweird.f32 %v1529
      %vm1537 = vmor %vm1535, %vm1536
      %v1538 = vsel %vm1537, %v1529, %v1534
      %v1539 = vrsqrt.pop %v1390
      %v1540 = vmul.f32 %v1539, %v1390
      %v1541 = vmul.f32 %v1540, %v1539
      %v1542 = vmul.f32 0.5, %v1541
      %v1543 = vsub.f32 1.5, %v1542
      %v1544 = vmul.f32 %v1539, %v1543
      %vm1545 = vweird.f32 %v1390
      %vm1546 = vweird.f32 %v1539
      %vm1547 = vmor %vm1545, %vm1546
      %v1548 = vsel %vm1547, %v1539, %v1544
      %v1549 = vrsqrt.pop %v1391
      %v1550 = vmul.f32 %v1549, %v1391
      %v1551 = vmul.f32 %v1550, %v1549
      %v1552 = vmul.f32 0.5, %v1551
      %v1553 = vsub.f32 1.5, %v1552
      %v1554 = vmul.f32 %v1549, %v1553
      %vm1555 = vweird.f32 %v1391
      %vm1556 = vweird.f32 %v1549
      %vm1557 = vmor %vm1555, %vm1556
      %v1558 = vsel %vm1557, %v1549, %v1554
      %v1559 = vrsqrt.pop %v1392
      %v1560 = vmul.f32 %v1559, %v1392
      %v1561 = vmul.f32 %v1560, %v1559
      %v1562 = vmul.f32 0.5, %v1561
      %v1563 = vsub.f32 1.5, %v1562
      %v1564 = vmul.f32 %v1559, %v1563
      %vm1565 = vweird.f32 %v1392
      %vm1566 = vweird.f32 %v1559
      %vm1567 = vmor %vm1565, %vm1566
      %v1568 = vsel %vm1567, %v1559, %v1564
      %v1569 = vrsqrt.pop %v1393
      %v1570 = vmul.f32 %v1569, %v1393
      %v1571 = vmul.f32 %v1570, %v1569
      %v1572 = vmul.f32 0.5, %v1571
      %v1573 = vsub.f32 1.5, %v1572
      %v1574 = vmul.f32 %v1569, %v1573
      %vm1575 = vweird.f32 %v1393
      %vm1576 = vweird.f32 %v1569
      %vm1577 = vmor %vm1575, %vm1576
      %v1578 = vsel %vm1577, %v1569, %v1574
      %v1579 = vrsqrt.pop %v1394
      %v1580 = vmul.f32 %v1579, %v1394
      %v1581 = vmul.f32 %v1580, %v1579
      %v1582 = vmul.f32 0.5, %v1581
      %v1583 = vsub.f32 1.5, %v1582
      %v1584 = vmul.f32 %v1579, %v1583
      %vm1585 = vweird.f32 %v1394
      %vm1586 = vweird.f32 %v1579
      %vm1587 = vmor %vm1585, %vm1586
      %v1588 = vsel %vm1587, %v1579, %v1584
      %v1589 = vrsqrt.pop %v1395
      %v1590 = vmul.f32 %v1589, %v1395
      %v1591 = vmul.f32 %v1590, %v1589
      %v1592 = vmul.f32 0.5, %v1591
      %v1593 = vsub.f32 1.5, %v1592
      %v1594 = vmul.f32 %v1589, %v1593
      %vm1595 = vweird.f32 %v1395
      %vm1596 = vweird.f32 %v1589
      %vm1597 = vmor %vm1595, %vm1596
      %v1598 = vsel %vm1597, %v1589, %v1594
      %v1599 = vrsqrt.pop %v1396
      %v1600 = vmul.f32 %v1599, %v1396
      %v1601 = vmul.f32 %v1600, %v1599
      %v1602 = vmul.f32 0.5, %v1601
      %v1603 = vsub.f32 1.5, %v1602
      %v1604 = vmul.f32 %v1599, %v1603
      %vm1605 = vweird.f32 %v1396
      %vm1606 = vweird.f32 %v1599
      %vm1607 = vmor %vm1605, %vm1606
      %v1608 = vsel %vm1607, %v1599, %v1604
      %v1609 = vrsqrt.pop %v1397
      %v1610 = vmul.f32 %v1609, %v1397
      %v1611 = vmul.f32 %v1610, %v1609
      %v1612 = vmul.f32 0.5, %v1611
      %v1613 = vsub.f32 1.5, %v1612
      %v1614 = vmul.f32 %v1609, %v1613
      %vm1615 = vweird.f32 %v1397
      %vm1616 = vweird.f32 %v1609
      %vm1617 = vmor %vm1615, %vm1616
      %v1618 = vsel %vm1617, %v1609, %v1614
      %v1619 = vrsqrt.pop %v1398
      %v1620 = vmul.f32 %v1619, %v1398
      %v1621 = vmul.f32 %v1620, %v1619
      %v1622 = vmul.f32 0.5, %v1621
      %v1623 = vsub.f32 1.5, %v1622
      %v1624 = vmul.f32 %v1619, %v1623
      %vm1625 = vweird.f32 %v1398
      %vm1626 = vweird.f32 %v1619
      %vm1627 = vmor %vm1625, %vm1626
      %v1628 = vsel %vm1627, %v1619, %v1624
      %v1629 = vrsqrt.pop %v1399
      %v1630 = vmul.f32 %v1629, %v1399
      %v1631 = vmul.f32 %v1630, %v1629
      %v1632 = vmul.f32 0.5, %v1631
      %v1633 = vsub.f32 1.5, %v1632
      %v1634 = vmul.f32 %v1629, %v1633
      %vm1635 = vweird.f32 %v1399
      %vm1636 = vweird.f32 %v1629
      %vm1637 = vmor %vm1635, %vm1636
      %v1638 = vsel %vm1637, %v1629, %v1634
      %v1639 = vrsqrt.pop %v1400
      %v1640 = vmul.f32 %v1639, %v1400
      %v1641 = vmul.f32 %v1640, %v1639
      %v1642 = vmul.f32 0.5, %v1641
      %v1643 = vsub.f32 1.5, %v1642
      %v1644 = vmul.f32 %v1639, %v1643
      %vm1645 = vweird.f32 %v1400
      %vm1646 = vweird.f32 %v1639
      %vm1647 = vmor %vm1645, %vm1646
      %v1648 = vsel %vm1647, %v1639, %v1644
      %v1649 = vrsqrt.pop %v1401
      %v1650 = vmul.f32 %v1649, %v1401
      %v1651 = vmul.f32 %v1650, %v1649
      %v1652 = vmul.f32 0.5, %v1651
      %v1653 = vsub.f32 1.5, %v1652
      %v1654 = vmul.f32 %v1649, %v1653
      %vm1655 = vweird.f32 %v1401
      %vm1656 = vweird.f32 %v1649
      %vm1657 = vmor %vm1655, %vm1656
      %v1658 = vsel %vm1657, %v1649, %v1654
      %v1659 = vrsqrt.pop %v1402
      %v1660 = vmul.f32 %v1659, %v1402
      %v1661 = vmul.f32 %v1660, %v1659
      %v1662 = vmul.f32 0.5, %v1661
      %v1663 = vsub.f32 1.5, %v1662
      %v1664 = vmul.f32 %v1659, %v1663
      %vm1665 = vweird.f32 %v1402
      %vm1666 = vweird.f32 %v1659
      %vm1667 = vmor %vm1665, %vm1666
      %v1668 = vsel %vm1667, %v1659, %v1664
      %v1669 = vrsqrt.pop %v1403
      %v1670 = vmul.f32 %v1669, %v1403
      %v1671 = vmul.f32 %v1670, %v1669
      %v1672 = vmul.f32 0.5, %v1671
      %v1673 = vsub.f32 1.5, %v1672
      %v1674 = vmul.f32 %v1669, %v1673
      %vm1675 = vweird.f32 %v1403
      %vm1676 = vweird.f32 %v1669
      %vm1677 = vmor %vm1675, %vm1676
      %v1678 = vsel %vm1677, %v1669, %v1674
      %v1679 = vrsqrt.pop %v1404
      %v1680 = vmul.f32 %v1679, %v1404
      %v1681 = vmul.f32 %v1680, %v1679
      %v1682 = vmul.f32 0.5, %v1681
      %v1683 = vsub.f32 1.5, %v1682
      %v1684 = vmul.f32 %v1679, %v1683
      %vm1685 = vweird.f32 %v1404
      %vm1686 = vweird.f32 %v1679
      %vm1687 = vmor %vm1685, %vm1686
      %v1688 = vsel %vm1687, %v1679, %v1684
      %v1689 = vrsqrt.pop %v1405
      %v1690 = vmul.f32 %v1689, %v1405
      %v1691 = vmul.f32 %v1690, %v1689
      %v1692 = vmul.f32 0.5, %v1691
      %v1693 = vsub.f32 1.5, %v1692
      %v1694 = vmul.f32 %v1689, %v1693
      %vm1695 = vweird.f32 %v1405
      %vm1696 = vweird.f32 %v1689
      %vm1697 = vmor %vm1695, %vm1696
      %v1698 = vsel %vm1697, %v1689, %v1694
      %v1699 = vrsqrt.pop %v1406
      %v1700 = vmul.f32 %v1699, %v1406
      %v1701 = vmul.f32 %v1700, %v1699
      %v1702 = vmul.f32 0.5, %v1701
      %v1703 = vsub.f32 1.5, %v1702
      %v1704 = vmul.f32 %v1699, %v1703
      %vm1705 = vweird.f32 %v1406
      %vm1706 = vweird.f32 %v1699
      %vm1707 = vmor %vm1705, %vm1706
      %v1708 = vsel %vm1707, %v1699, %v1704
      %v1709 = vrsqrt.pop %v1407
      %v1710 = vmul.f32 %v1709, %v1407
      %v1711 = vmul.f32 %v1710, %v1709
      %v1712 = vmul.f32 0.5, %v1711
      %v1713 = vsub.f32 1.5, %v1712
      %v1714 = vmul.f32 %v1709, %v1713
      %vm1715 = vweird.f32 %v1407
      %vm1716 = vweird.f32 %v1709
      %vm1717 = vmor %vm1715, %vm1716
      %v1718 = vsel %vm1717, %v1709, %v1714
      %v1719 = vrsqrt.pop %v1408
      %v1720 = vmul.f32 %v1719, %v1408
      %v1721 = vmul.f32 %v1720, %v1719
      %v1722 = vmul.f32 0.5, %v1721
      %v1723 = vsub.f32 1.5, %v1722
      %v1724 = vmul.f32 %v1719, %v1723
      %vm1725 = vweird.f32 %v1408
      %vm1726 = vweird.f32 %v1719
      %vm1727 = vmor %vm1725, %vm1726
      %v1728 = vsel %vm1727, %v1719, %v1724
      %v1729 = vmul.f32 %v1057, %v1418
      %v1730 = vmul.f32 %v1058, %v1428
      %v1731 = vmul.f32 %v1059, %v1438
      %v1732 = vmul.f32 %v1060, %v1448
      %v1733 = vmul.f32 %v1061, %v1458
      %v1734 = vmul.f32 %v1062, %v1468
      %v1735 = vmul.f32 %v1063, %v1478
      %v1736 = vmul.f32 %v1064, %v1488
      %v1737 = vmul.f32 %v1065, %v1498
      %v1738 = vmul.f32 %v1066, %v1508
      %v1739 = vmul.f32 %v1067, %v1518
      %v1740 = vmul.f32 %v1068, %v1528
      %v1741 = vmul.f32 %v1069, %v1538
      %v1742 = vmul.f32 %v1070, %v1548
      %v1743 = vmul.f32 %v1071, %v1558
      %v1744 = vmul.f32 %v1072, %v1568
      %v1745 = vmul.f32 %v1073, %v1578
      %v1746 = vmul.f32 %v1074, %v1588
      %v1747 = vmul.f32 %v1075, %v1598
      %v1748 = vmul.f32 %v1076, %v1608
      %v1749 = vmul.f32 %v1077, %v1618
      %v1750 = vmul.f32 %v1078, %v1628
      %v1751 = vmul.f32 %v1079, %v1638
      %v1752 = vmul.f32 %v1080, %v1648
      %v1753 = vmul.f32 %v1081, %v1658
      %v1754 = vmul.f32 %v1082, %v1668
      %v1755 = vmul.f32 %v1083, %v1678
      %v1756 = vmul.f32 %v1084, %v1688
      %v1757 = vmul.f32 %v1085, %v1698
      %v1758 = vmul.f32 %v1086, %v1708
      %v1759 = vmul.f32 %v1087, %v1718
      %v1760 = vmul.f32 %v1088, %v1728
      %v1761 = vld [vmem:[%s6] sm:$0x1]
      %v1763 = vperm.slane %v1761, 0
      %1764 = vrot.lane.b32.xlu0 %v1763, 32
      %v1765 = vpop.permute.xlu0 %1764
      %v1767 = vmul.f32 %v1729, %v1765
      %v1768 = vmul.f32 %v1730, %v1765
      %v1769 = vmul.f32 %v1731, %v1765
      %v1770 = vmul.f32 %v1732, %v1765
      %v1771 = vmul.f32 %v1733, %v1765
      %v1772 = vmul.f32 %v1734, %v1765
      %v1773 = vmul.f32 %v1735, %v1765
      %v1774 = vmul.f32 %v1736, %v1765
      %v1775 = vmul.f32 %v1737, %v1765
      %v1776 = vmul.f32 %v1738, %v1765
      %v1777 = vmul.f32 %v1739, %v1765
      %v1778 = vmul.f32 %v1740, %v1765
      %v1779 = vmul.f32 %v1741, %v1765
      %v1780 = vmul.f32 %v1742, %v1765
      %v1781 = vmul.f32 %v1743, %v1765
      %v1782 = vmul.f32 %v1744, %v1765
      %v1783 = vmul.f32 %v1745, %v1765
      %v1784 = vmul.f32 %v1746, %v1765
      %v1785 = vmul.f32 %v1747, %v1765
      %v1786 = vmul.f32 %v1748, %v1765
      %v1787 = vmul.f32 %v1749, %v1765
      %v1788 = vmul.f32 %v1750, %v1765
      %v1789 = vmul.f32 %v1751, %v1765
      %v1790 = vmul.f32 %v1752, %v1765
      %v1791 = vmul.f32 %v1753, %v1765
      %v1792 = vmul.f32 %v1754, %v1765
      %v1793 = vmul.f32 %v1755, %v1765
      %v1794 = vmul.f32 %v1756, %v1765
      %v1795 = vmul.f32 %v1757, %v1765
      %v1796 = vmul.f32 %v1758, %v1765
      %v1797 = vmul.f32 %v1759, %v1765
      %v1798 = vmul.f32 %v1760, %v1765
      %v1799 = vld [vmem:[%s7] sm:$0x1]
      %v1801 = vperm.slane %v1799, 0
      %1802 = vrot.lane.b32.xlu0 %v1801, 32
      %v1803 = vpop.permute.xlu0 %1802
      %v1805 = vadd.f32 %v1767, %v1803
      %v1806 = vadd.f32 %v1768, %v1803
      %v1807 = vadd.f32 %v1769, %v1803
      %v1808 = vadd.f32 %v1770, %v1803
      %v1809 = vadd.f32 %v1771, %v1803
      %v1810 = vadd.f32 %v1772, %v1803
      %v1811 = vadd.f32 %v1773, %v1803
      %v1812 = vadd.f32 %v1774, %v1803
      %v1813 = vadd.f32 %v1775, %v1803
      %v1814 = vadd.f32 %v1776, %v1803
      %v1815 = vadd.f32 %v1777, %v1803
      %v1816 = vadd.f32 %v1778, %v1803
      %v1817 = vadd.f32 %v1779, %v1803
      %v1818 = vadd.f32 %v1780, %v1803
      %v1819 = vadd.f32 %v1781, %v1803
      %v1820 = vadd.f32 %v1782, %v1803
      %v1821 = vadd.f32 %v1783, %v1803
      %v1822 = vadd.f32 %v1784, %v1803
      %v1823 = vadd.f32 %v1785, %v1803
      %v1824 = vadd.f32 %v1786, %v1803
      %v1825 = vadd.f32 %v1787, %v1803
      %v1826 = vadd.f32 %v1788, %v1803
      %v1827 = vadd.f32 %v1789, %v1803
      %v1828 = vadd.f32 %v1790, %v1803
      %v1829 = vadd.f32 %v1791, %v1803
      %v1830 = vadd.f32 %v1792, %v1803
      %v1831 = vadd.f32 %v1793, %v1803
      %v1832 = vadd.f32 %v1794, %v1803
      %v1833 = vadd.f32 %v1795, %v1803
      %v1834 = vadd.f32 %v1796, %v1803
      %v1835 = vadd.f32 %v1797, %v1803
      %v1836 = vadd.f32 %v1798, %v1803
      %v1837 = vmax.f32 %v1805, 0.0
      %v1838 = vmax.f32 %v1806, 0.0
      %v1839 = vmax.f32 %v1807, 0.0
      %v1840 = vmax.f32 %v1808, 0.0
      %v1841 = vmax.f32 %v1809, 0.0
      %v1842 = vmax.f32 %v1810, 0.0
      %v1843 = vmax.f32 %v1811, 0.0
      %v1844 = vmax.f32 %v1812, 0.0
      %v1845 = vmax.f32 %v1813, 0.0
      %v1846 = vmax.f32 %v1814, 0.0
      %v1847 = vmax.f32 %v1815, 0.0
      %v1848 = vmax.f32 %v1816, 0.0
      %v1849 = vmax.f32 %v1817, 0.0
      %v1850 = vmax.f32 %v1818, 0.0
      %v1851 = vmax.f32 %v1819, 0.0
      %v1852 = vmax.f32 %v1820, 0.0
      %v1853 = vmax.f32 %v1821, 0.0
      %v1854 = vmax.f32 %v1822, 0.0
      %v1855 = vmax.f32 %v1823, 0.0
      %v1856 = vmax.f32 %v1824, 0.0
      %v1857 = vmax.f32 %v1825, 0.0
      %v1858 = vmax.f32 %v1826, 0.0
      %v1859 = vmax.f32 %v1827, 0.0
      %v1860 = vmax.f32 %v1828, 0.0
      %v1861 = vmax.f32 %v1829, 0.0
      %v1862 = vmax.f32 %v1830, 0.0
      %v1863 = vmax.f32 %v1831, 0.0
      %v1864 = vmax.f32 %v1832, 0.0
      %v1865 = vmax.f32 %v1833, 0.0
      %v1866 = vmax.f32 %v1834, 0.0
      %v1867 = vmax.f32 %v1835, 0.0
      %v1868 = vmax.f32 %v1836, 0.0
      %v1869 = vld [vmem:[%s8] sm:$0xff]
      %v1870 = vld [vmem:[%s8 + $0x8] sm:$0xff]
      %v1871 = vld [vmem:[%s8 + $0x10] sm:$0xff]
      %v1872 = vld [vmem:[%s8 + $0x18] sm:$0xff]
      %v1873 = vld [vmem:[%s9] sm:$0x1]
      %v1875 = vperm.slane %v1873, 0
      %1909 = vrot.lane.b32.xlu0 %v1837, 96
      %v1910 = vpop.permute.xlu0 %1909
      %1911 = vrot.lane.b32.xlu0 %v1838, 96
      %v1912 = vpop.permute.xlu0 %1911
      %1913 = vrot.lane.b32.xlu0 %v1839, 96
      %v1914 = vpop.permute.xlu0 %1913
      %1915 = vrot.lane.b32.xlu0 %v1840, 96
      %v1916 = vpop.permute.xlu0 %1915
      %1917 = vrot.lane.b32.xlu0 %v1841, 96
      %v1918 = vpop.permute.xlu0 %1917
      %1919 = vrot.lane.b32.xlu0 %v1842, 96
      %v1920 = vpop.permute.xlu0 %1919
      %1921 = vrot.lane.b32.xlu0 %v1843, 96
      %v1922 = vpop.permute.xlu0 %1921
      %1923 = vrot.lane.b32.xlu0 %v1844, 96
      %v1924 = vpop.permute.xlu0 %1923
      %1925 = vrot.lane.b32.xlu0 %v1845, 96
      %v1926 = vpop.permute.xlu0 %1925
      %1927 = vrot.lane.b32.xlu0 %v1846, 96
      %v1928 = vpop.permute.xlu0 %1927
      %1929 = vrot.lane.b32.xlu0 %v1847, 96
      %v1930 = vpop.permute.xlu0 %1929
      %1931 = vrot.lane.b32.xlu0 %v1848, 96
      %v1932 = vpop.permute.xlu0 %1931
      %1933 = vrot.lane.b32.xlu0 %v1849, 96
      %v1934 = vpop.permute.xlu0 %1933
      %1935 = vrot.lane.b32.xlu0 %v1850, 96
      %v1936 = vpop.permute.xlu0 %1935
      %1937 = vrot.lane.b32.xlu0 %v1851, 96
      %v1938 = vpop.permute.xlu0 %1937
      %1939 = vrot.lane.b32.xlu0 %v1852, 96
      %v1940 = vpop.permute.xlu0 %1939
      %1941 = vrot.lane.b32.xlu0 %v1853, 96
      %v1942 = vpop.permute.xlu0 %1941
      %1943 = vrot.lane.b32.xlu0 %v1854, 96
      %v1944 = vpop.permute.xlu0 %1943
      %1945 = vrot.lane.b32.xlu0 %v1855, 96
      %v1946 = vpop.permute.xlu0 %1945
      %1947 = vrot.lane.b32.xlu0 %v1856, 96
      %v1948 = vpop.permute.xlu0 %1947
      %1949 = vrot.lane.b32.xlu0 %v1857, 96
      %v1950 = vpop.permute.xlu0 %1949
      %1951 = vrot.lane.b32.xlu0 %v1858, 96
      %v1952 = vpop.permute.xlu0 %1951
      %1953 = vrot.lane.b32.xlu0 %v1859, 96
      %v1954 = vpop.permute.xlu0 %1953
      %1955 = vrot.lane.b32.xlu0 %v1860, 96
      %v1956 = vpop.permute.xlu0 %1955
      %1957 = vrot.lane.b32.xlu0 %v1861, 96
      %v1958 = vpop.permute.xlu0 %1957
      %1959 = vrot.lane.b32.xlu0 %v1862, 96
      %v1960 = vpop.permute.xlu0 %1959
      %1961 = vrot.lane.b32.xlu0 %v1863, 96
      %v1962 = vpop.permute.xlu0 %1961
      %1963 = vrot.lane.b32.xlu0 %v1864, 96
      %v1964 = vpop.permute.xlu0 %1963
      %1965 = vrot.lane.b32.xlu0 %v1865, 96
      %v1966 = vpop.permute.xlu0 %1965
      %1967 = vrot.lane.b32.xlu0 %v1866, 96
      %v1968 = vpop.permute.xlu0 %1967
      %1969 = vrot.lane.b32.xlu0 %v1867, 96
      %v1970 = vpop.permute.xlu0 %1969
      %1971 = vrot.lane.b32.xlu0 %v1868, 96
      %v1972 = vpop.permute.xlu0 %1971
      %v1973 = vsel %vm921, %v1910, 0
      %v1975 = vsel %vm921, %v1912, 0
      %v1977 = vsel %vm921, %v1914, 0
      %v1979 = vsel %vm921, %v1916, 0
      %v1981 = vsel %vm921, %v1918, 0
      %v1983 = vsel %vm921, %v1920, 0
      %v1985 = vsel %vm921, %v1922, 0
      %v1987 = vsel %vm921, %v1924, 0
      %v1989 = vsel %vm921, %v1926, 0
      %v1991 = vsel %vm921, %v1928, 0
      %v1993 = vsel %vm921, %v1930, 0
      %v1995 = vsel %vm921, %v1932, 0
      %v1997 = vsel %vm921, %v1934, 0
      %v1999 = vsel %vm921, %v1936, 0
      %v2001 = vsel %vm921, %v1938, 0
      %v2003 = vsel %vm921, %v1940, 0
      %v2005 = vsel %vm921, %v1942, 0
      %v2007 = vsel %vm921, %v1944, 0
      %v2009 = vsel %vm921, %v1946, 0
      %v2011 = vsel %vm921, %v1948, 0
      %v2013 = vsel %vm921, %v1950, 0
      %v2015 = vsel %vm921, %v1952, 0
      %v2017 = vsel %vm921, %v1954, 0
      %v2019 = vsel %vm921, %v1956, 0
      %v2021 = vsel %vm921, %v1958, 0
      %v2023 = vsel %vm921, %v1960, 0
      %v2025 = vsel %vm921, %v1962, 0
      %v2027 = vsel %vm921, %v1964, 0
      %v2029 = vsel %vm921, %v1966, 0
      %v2031 = vsel %vm921, %v1968, 0
      %v2033 = vsel %vm921, %v1970, 0
      %v2035 = vsel %vm921, %v1972, 0
      %2037 = vmatpush.msra.mxu0 0.0
      %2038 = vmatpush.msra.mxu0 0.0
      %2039 = vmatpush.msra.mxu0 0.0
      %2040 = vmatpush.msra.mxu0 0.0
      %2041 = vmatpush.msra.mxu0 0.0
      %2042 = vmatpush.msra.mxu0 0.0
      %2043 = vmatpush.msra.mxu0 0.0
      %2044 = vmatpush.msra.mxu0 0.0
      %2045 = vmatpush.msra.mxu0 0.0
      %2046 = vmatpush.msra.mxu0 0.0
      %2047 = vmatpush.msra.mxu0 0.0
      %2048 = vmatpush.msra.mxu0 0.0
      %2049 = vmatpush.msra.mxu0 %v1872
      %2050 = vmatpush.msra.mxu0 %v1871
      %2051 = vmatpush.msra.mxu0 %v1870
      %2052 = vmatpush.msra.mxu0 %v1869
      %2053 = vmatmul.f32.gmra.mxu0 %v1973
      %v2054 = vpop.f32.mrf.mxu0
      %v2055 = vadd.f32 %v1875, %v2054
      %2056 = vmatmul.f32.gmra.mxu0 %v1975
      %v2057 = vpop.f32.mrf.mxu0
      %v2058 = vadd.f32 %v1875, %v2057
      %2059 = vmatmul.f32.gmra.mxu0 %v1977
      %v2060 = vpop.f32.mrf.mxu0
      %v2061 = vadd.f32 %v1875, %v2060
      %2062 = vmatmul.f32.gmra.mxu0 %v1979
      %v2063 = vpop.f32.mrf.mxu0
      %v2064 = vadd.f32 %v1875, %v2063
      %2065 = vmatmul.f32.gmra.mxu0 %v1981
      %v2066 = vpop.f32.mrf.mxu0
      %v2067 = vadd.f32 %v1875, %v2066
      %2068 = vmatmul.f32.gmra.mxu0 %v1983
      %v2069 = vpop.f32.mrf.mxu0
      %v2070 = vadd.f32 %v1875, %v2069
      %2071 = vmatmul.f32.gmra.mxu0 %v1985
      %v2072 = vpop.f32.mrf.mxu0
      %v2073 = vadd.f32 %v1875, %v2072
      %2074 = vmatmul.f32.gmra.mxu0 %v1987
      %v2075 = vpop.f32.mrf.mxu0
      %v2076 = vadd.f32 %v1875, %v2075
      %2077 = vmatmul.f32.gmra.mxu0 %v1989
      %v2078 = vpop.f32.mrf.mxu0
      %v2079 = vadd.f32 %v1875, %v2078
      %2080 = vmatmul.f32.gmra.mxu0 %v1991
      %v2081 = vpop.f32.mrf.mxu0
      %v2082 = vadd.f32 %v1875, %v2081
      %2083 = vmatmul.f32.gmra.mxu0 %v1993
      %v2084 = vpop.f32.mrf.mxu0
      %v2085 = vadd.f32 %v1875, %v2084
      %2086 = vmatmul.f32.gmra.mxu0 %v1995
      %v2087 = vpop.f32.mrf.mxu0
      %v2088 = vadd.f32 %v1875, %v2087
      %2089 = vmatmul.f32.gmra.mxu0 %v1997
      %v2090 = vpop.f32.mrf.mxu0
      %v2091 = vadd.f32 %v1875, %v2090
      %2092 = vmatmul.f32.gmra.mxu0 %v1999
      %v2093 = vpop.f32.mrf.mxu0
      %v2094 = vadd.f32 %v1875, %v2093
      %2095 = vmatmul.f32.gmra.mxu0 %v2001
      %v2096 = vpop.f32.mrf.mxu0
      %v2097 = vadd.f32 %v1875, %v2096
      %2098 = vmatmul.f32.gmra.mxu0 %v2003
      %v2099 = vpop.f32.mrf.mxu0
      %v2100 = vadd.f32 %v1875, %v2099
      %2101 = vmatmul.f32.gmra.mxu0 %v2005
      %v2102 = vpop.f32.mrf.mxu0
      %v2103 = vadd.f32 %v1875, %v2102
      %2104 = vmatmul.f32.gmra.mxu0 %v2007
      %v2105 = vpop.f32.mrf.mxu0
      %v2106 = vadd.f32 %v1875, %v2105
      %2107 = vmatmul.f32.gmra.mxu0 %v2009
      %v2108 = vpop.f32.mrf.mxu0
      %v2109 = vadd.f32 %v1875, %v2108
      %2110 = vmatmul.f32.gmra.mxu0 %v2011
      %v2111 = vpop.f32.mrf.mxu0
      %v2112 = vadd.f32 %v1875, %v2111
      %2113 = vmatmul.f32.gmra.mxu0 %v2013
      %v2114 = vpop.f32.mrf.mxu0
      %v2115 = vadd.f32 %v1875, %v2114
      %2116 = vmatmul.f32.gmra.mxu0 %v2015
      %v2117 = vpop.f32.mrf.mxu0
      %v2118 = vadd.f32 %v1875, %v2117
      %2119 = vmatmul.f32.gmra.mxu0 %v2017
      %v2120 = vpop.f32.mrf.mxu0
      %v2121 = vadd.f32 %v1875, %v2120
      %2122 = vmatmul.f32.gmra.mxu0 %v2019
      %v2123 = vpop.f32.mrf.mxu0
      %v2124 = vadd.f32 %v1875, %v2123
      %2125 = vmatmul.f32.gmra.mxu0 %v2021
      %v2126 = vpop.f32.mrf.mxu0
      %v2127 = vadd.f32 %v1875, %v2126
      %2128 = vmatmul.f32.gmra.mxu0 %v2023
      %v2129 = vpop.f32.mrf.mxu0
      %v2130 = vadd.f32 %v1875, %v2129
      %2131 = vmatmul.f32.gmra.mxu0 %v2025
      %v2132 = vpop.f32.mrf.mxu0
      %v2133 = vadd.f32 %v1875, %v2132
      %2134 = vmatmul.f32.gmra.mxu0 %v2027
      %v2135 = vpop.f32.mrf.mxu0
      %v2136 = vadd.f32 %v1875, %v2135
      %2137 = vmatmul.f32.gmra.mxu0 %v2029
      %v2138 = vpop.f32.mrf.mxu0
      %v2139 = vadd.f32 %v1875, %v2138
      %2140 = vmatmul.f32.gmra.mxu0 %v2031
      %v2141 = vpop.f32.mrf.mxu0
      %v2142 = vadd.f32 %v1875, %v2141
      %2143 = vmatmul.f32.gmra.mxu0 %v2033
      %v2144 = vpop.f32.mrf.mxu0
      %v2145 = vadd.f32 %v1875, %v2144
      %2146 = vmatmul.f32.gmra.mxu0 %v2035
      %v2147 = vpop.f32.mrf.mxu0
      %v2148 = vadd.f32 %v1875, %v2147
      %2149 = vdwg.mxu0
      %v2150 = vadd.f32 %v723, %v2055
      %v2151 = vadd.f32 %v724, %v2058
      %v2152 = vadd.f32 %v725, %v2061
      %v2153 = vadd.f32 %v726, %v2064
      %v2154 = vadd.f32 %v727, %v2067
      %v2155 = vadd.f32 %v728, %v2070
      %v2156 = vadd.f32 %v729, %v2073
      %v2157 = vadd.f32 %v730, %v2076
      %v2158 = vadd.f32 %v731, %v2079
      %v2159 = vadd.f32 %v732, %v2082
      %v2160 = vadd.f32 %v733, %v2085
      %v2161 = vadd.f32 %v734, %v2088
      %v2162 = vadd.f32 %v735, %v2091
      %v2163 = vadd.f32 %v736, %v2094
      %v2164 = vadd.f32 %v737, %v2097
      %v2165 = vadd.f32 %v738, %v2100
      %v2166 = vadd.f32 %v739, %v2103
      %v2167 = vadd.f32 %v740, %v2106
      %v2168 = vadd.f32 %v741, %v2109
      %v2169 = vadd.f32 %v742, %v2112
      %v2170 = vadd.f32 %v743, %v2115
      %v2171 = vadd.f32 %v744, %v2118
      %v2172 = vadd.f32 %v745, %v2121
      %v2173 = vadd.f32 %v746, %v2124
      %v2174 = vadd.f32 %v747, %v2127
      %v2175 = vadd.f32 %v748, %v2130
      %v2176 = vadd.f32 %v749, %v2133
      %v2177 = vadd.f32 %v750, %v2136
      %v2178 = vadd.f32 %v751, %v2139
      %v2179 = vadd.f32 %v752, %v2142
      %v2180 = vadd.f32 %v753, %v2145
      %v2181 = vadd.f32 %v754, %v2148
      %2182 = vrot.lane.b32.xlu0 %v407, 24
      %v2183 = vpop.permute.xlu0 %2182
      %2184 = vrot.lane.b32.xlu0 %v408, 24
      %v2185 = vpop.permute.xlu0 %2184
      %2186 = vrot.lane.b32.xlu0 %v409, 24
      %v2187 = vpop.permute.xlu0 %2186
      %2188 = vrot.lane.b32.xlu0 %v410, 24
      %v2189 = vpop.permute.xlu0 %2188
      %2190 = vrot.lane.b32.xlu0 %v411, 24
      %v2191 = vpop.permute.xlu0 %2190
      %2192 = vrot.lane.b32.xlu0 %v412, 24
      %v2193 = vpop.permute.xlu0 %2192
      %2194 = vrot.lane.b32.xlu0 %v413, 24
      %v2195 = vpop.permute.xlu0 %2194
      %2196 = vrot.lane.b32.xlu0 %v414, 24
      %v2197 = vpop.permute.xlu0 %2196
      %2198 = vrot.lane.b32.xlu0 %v415, 24
      %v2199 = vpop.permute.xlu0 %2198
      %2200 = vrot.lane.b32.xlu0 %v416, 24
      %v2201 = vpop.permute.xlu0 %2200
      %2202 = vrot.lane.b32.xlu0 %v417, 24
      %v2203 = vpop.permute.xlu0 %2202
      %2204 = vrot.lane.b32.xlu0 %v418, 24
      %v2205 = vpop.permute.xlu0 %2204
      %2206 = vrot.lane.b32.xlu0 %v419, 24
      %v2207 = vpop.permute.xlu0 %2206
      %2208 = vrot.lane.b32.xlu0 %v420, 24
      %v2209 = vpop.permute.xlu0 %2208
      %2210 = vrot.lane.b32.xlu0 %v421, 24
      %v2211 = vpop.permute.xlu0 %2210
      %2212 = vrot.lane.b32.xlu0 %v422, 24
      %v2213 = vpop.permute.xlu0 %2212
      %2214 = vrot.lane.b32.xlu0 %v423, 24
      %v2215 = vpop.permute.xlu0 %2214
      %2216 = vrot.lane.b32.xlu0 %v424, 24
      %v2217 = vpop.permute.xlu0 %2216
      %2218 = vrot.lane.b32.xlu0 %v425, 24
      %v2219 = vpop.permute.xlu0 %2218
      %2220 = vrot.lane.b32.xlu0 %v426, 24
      %v2221 = vpop.permute.xlu0 %2220
      %2222 = vrot.lane.b32.xlu0 %v427, 24
      %v2223 = vpop.permute.xlu0 %2222
      %2224 = vrot.lane.b32.xlu0 %v428, 24
      %v2225 = vpop.permute.xlu0 %2224
      %2226 = vrot.lane.b32.xlu0 %v429, 24
      %v2227 = vpop.permute.xlu0 %2226
      %2228 = vrot.lane.b32.xlu0 %v430, 24
      %v2229 = vpop.permute.xlu0 %2228
      %2230 = vrot.lane.b32.xlu0 %v431, 24
      %v2231 = vpop.permute.xlu0 %2230
      %2232 = vrot.lane.b32.xlu0 %v432, 24
      %v2233 = vpop.permute.xlu0 %2232
      %2234 = vrot.lane.b32.xlu0 %v433, 24
      %v2235 = vpop.permute.xlu0 %2234
      %2236 = vrot.lane.b32.xlu0 %v434, 24
      %v2237 = vpop.permute.xlu0 %2236
      %2238 = vrot.lane.b32.xlu0 %v435, 24
      %v2239 = vpop.permute.xlu0 %2238
      %2240 = vrot.lane.b32.xlu0 %v436, 24
      %v2241 = vpop.permute.xlu0 %2240
      %2242 = vrot.lane.b32.xlu0 %v437, 24
      %v2243 = vpop.permute.xlu0 %2242
      %2244 = vrot.lane.b32.xlu0 %v438, 24
      %v2245 = vpop.permute.xlu0 %2244
      %v2278 = vsel %vm921, %v2150, %v2183
      %v2279 = vsel %vm921, %v2151, %v2185
      %v2280 = vsel %vm921, %v2152, %v2187
      %v2281 = vsel %vm921, %v2153, %v2189
      %v2282 = vsel %vm921, %v2154, %v2191
      %v2283 = vsel %vm921, %v2155, %v2193
      %v2284 = vsel %vm921, %v2156, %v2195
      %v2285 = vsel %vm921, %v2157, %v2197
      %v2286 = vsel %vm921, %v2158, %v2199
      %v2287 = vsel %vm921, %v2159, %v2201
      %v2288 = vsel %vm921, %v2160, %v2203
      %v2289 = vsel %vm921, %v2161, %v2205
      %v2290 = vsel %vm921, %v2162, %v2207
      %v2291 = vsel %vm921, %v2163, %v2209
      %v2292 = vsel %vm921, %v2164, %v2211
      %v2293 = vsel %vm921, %v2165, %v2213
      %v2294 = vsel %vm921, %v2166, %v2215
      %v2295 = vsel %vm921, %v2167, %v2217
      %v2296 = vsel %vm921, %v2168, %v2219
      %v2297 = vsel %vm921, %v2169, %v2221
      %v2298 = vsel %vm921, %v2170, %v2223
      %v2299 = vsel %vm921, %v2171, %v2225
      %v2300 = vsel %vm921, %v2172, %v2227
      %v2301 = vsel %vm921, %v2173, %v2229
      %v2302 = vsel %vm921, %v2174, %v2231
      %v2303 = vsel %vm921, %v2175, %v2233
      %v2304 = vsel %vm921, %v2176, %v2235
      %v2305 = vsel %vm921, %v2177, %v2237
      %v2306 = vsel %vm921, %v2178, %v2239
      %v2307 = vsel %vm921, %v2179, %v2241
      %v2308 = vsel %vm921, %v2180, %v2243
      %v2309 = vsel %vm921, %v2181, %v2245
      %v2310 = vpack.c.bf16 %v2279, %v2278
      %v2311 = vpack.c.bf16 %v2281, %v2280
      %v2312 = vpack.c.bf16 %v2283, %v2282
      %v2313 = vpack.c.bf16 %v2285, %v2284
      %v2314 = vpack.c.bf16 %v2287, %v2286
      %v2315 = vpack.c.bf16 %v2289, %v2288
      %v2316 = vpack.c.bf16 %v2291, %v2290
      %v2317 = vpack.c.bf16 %v2293, %v2292
      %v2318 = vpack.c.bf16 %v2295, %v2294
      %v2319 = vpack.c.bf16 %v2297, %v2296
      %v2320 = vpack.c.bf16 %v2299, %v2298
      %v2321 = vpack.c.bf16 %v2301, %v2300
      %v2322 = vpack.c.bf16 %v2303, %v2302
      %v2323 = vpack.c.bf16 %v2305, %v2304
      %v2324 = vpack.c.bf16 %v2307, %v2306
      %v2325 = vpack.c.bf16 %v2309, %v2308
      %v2326 = vld [vmem:[%s380] sm:$0x3]
      %v2327 = vlaneseq
      %v2328 = vshrl.u32 %v2327, 7
      %v2329 = vadd.s32 %v2328, 8
      %v2330 = vadd.s32 %v2328, 16
      %v2331 = vadd.s32 %v2328, 24
      %v2332 = vadd.s32 %v2328, 32
      %v2333 = vadd.s32 %v2328, 40
      %v2334 = vadd.s32 %v2328, 48
      %v2335 = vadd.s32 %v2328, 56
      %s2336 = smul.u32 %s25, 64
      %v2337 = vstv %s2336
      %v2338 = vadd.s32 %v2328, %v2337
      %v2339 = vadd.s32 %v2329, %v2337
      %v2340 = vadd.s32 %v2330, %v2337
      %v2341 = vadd.s32 %v2331, %v2337
      %v2342 = vadd.s32 %v2332, %v2337
      %v2343 = vadd.s32 %v2333, %v2337
      %v2344 = vadd.s32 %v2334, %v2337
      %v2345 = vadd.s32 %v2335, %v2337
      %v2346 = vperm.slane %v2326, 0
      %v2347 = vperm.slane %v2326, 1
      %vm2348 = vcmp.eq.s32.totalorder %v2338, %v2346
      %vm2349 = vcmp.eq.s32.totalorder %v2338, %v2347
      %vm2350 = vcmp.eq.s32.totalorder %v2339, %v2346
      %vm2351 = vcmp.eq.s32.totalorder %v2339, %v2347
      %vm2352 = vcmp.eq.s32.totalorder %v2340, %v2346
      %vm2353 = vcmp.eq.s32.totalorder %v2340, %v2347
      %vm2354 = vcmp.eq.s32.totalorder %v2341, %v2346
      %vm2355 = vcmp.eq.s32.totalorder %v2341, %v2347
      %vm2356 = vcmp.eq.s32.totalorder %v2342, %v2346
      %vm2357 = vcmp.eq.s32.totalorder %v2342, %v2347
      %vm2358 = vcmp.eq.s32.totalorder %v2343, %v2346
      %vm2359 = vcmp.eq.s32.totalorder %v2343, %v2347
      %vm2360 = vcmp.eq.s32.totalorder %v2344, %v2346
      %vm2361 = vcmp.eq.s32.totalorder %v2344, %v2347
      %vm2362 = vcmp.eq.s32.totalorder %v2345, %v2346
      %vm2363 = vcmp.eq.s32.totalorder %v2345, %v2347
      %v2364 = vsel %vm2348, 1, 0
      %v2365 = vsel %vm2349, 1, 0
      %v2366 = vsel %vm2350, 1, 0
      %v2367 = vsel %vm2351, 1, 0
      %v2368 = vsel %vm2352, 1, 0
      %v2369 = vsel %vm2353, 1, 0
      %v2370 = vsel %vm2354, 1, 0
      %v2371 = vsel %vm2355, 1, 0
      %v2372 = vsel %vm2356, 1, 0
      %v2373 = vsel %vm2357, 1, 0
      %v2374 = vsel %vm2358, 1, 0
      %v2375 = vsel %vm2359, 1, 0
      %v2376 = vsel %vm2360, 1, 0
      %v2377 = vsel %vm2361, 1, 0
      %v2378 = vsel %vm2362, 1, 0
      %v2379 = vsel %vm2363, 1, 0
      %v2380 = vcvt.s32.f32 %v2364
      %v2381 = vcvt.s32.f32 %v2365
      %v2382 = vcvt.s32.f32 %v2366
      %v2383 = vcvt.s32.f32 %v2367
      %v2384 = vcvt.s32.f32 %v2368
      %v2385 = vcvt.s32.f32 %v2369
      %v2386 = vcvt.s32.f32 %v2370
      %v2387 = vcvt.s32.f32 %v2371
      %v2388 = vcvt.s32.f32 %v2372
      %v2389 = vcvt.s32.f32 %v2373
      %v2390 = vcvt.s32.f32 %v2374
      %v2391 = vcvt.s32.f32 %v2375
      %v2392 = vcvt.s32.f32 %v2376
      %v2393 = vcvt.s32.f32 %v2377
      %v2394 = vcvt.s32.f32 %v2378
      %v2395 = vcvt.s32.f32 %v2379
      %v2396 = vpack.c.bf16 %v2382, %v2380
      %v2397 = vpack.c.bf16 %v2383, %v2381
      %v2398 = vpack.c.bf16 %v2386, %v2384
      %v2399 = vpack.c.bf16 %v2387, %v2385
      %v2400 = vpack.c.bf16 %v2390, %v2388
      %v2401 = vpack.c.bf16 %v2391, %v2389
      %v2402 = vpack.c.bf16 %v2394, %v2392
      %v2403 = vpack.c.bf16 %v2395, %v2393
      %v2404 = vld [vmem:[%s392] sm:$0xff]
      %v2405 = vld [vmem:[%s392 + $0x8] sm:$0xff]
      %v2406 = vld [vmem:[%s392 + $0x10] sm:$0xff]
      %v2407 = vld [vmem:[%s392 + $0x18] sm:$0xff]
      %v2408 = vld [vmem:[%s392 + $0x20] sm:$0xff]
      %v2409 = vld [vmem:[%s392 + $0x28] sm:$0xff]
      %v2410 = vld [vmem:[%s392 + $0x30] sm:$0xff]
      %v2411 = vld [vmem:[%s392 + $0x38] sm:$0xff]
      %2412 = vmatpush.bf16.msra.mxu0 %v2317
      %2413 = vmatpush.bf16.msra.mxu0 %v2316
      %2414 = vmatpush.bf16.msra.mxu0 %v2315
      %2415 = vmatpush.bf16.msra.mxu0 %v2314
      %2416 = vmatpush.bf16.msra.mxu0 %v2313
      %2417 = vmatpush.bf16.msra.mxu0 %v2312
      %2418 = vmatpush.bf16.msra.mxu0 %v2311
      %2419 = vmatpush.bf16.msra.mxu0 %v2310
      %2420 = vmatmul.bf16.gmra.mxu0 %v2396
      %v2421 = vpop.f32.mrf.mxu0
      %v2422 = vadd.f32 0.0, %v2421
      %v2423 = vpop.f32.mrf.mxu0
      %v2424 = vadd.f32 0.0, %v2423
      %2425 = vmatmul.bf16.gmra.mxu0 %v2398
      %v2426 = vpop.f32.mrf.mxu0
      %v2427 = vadd.f32 0.0, %v2426
      %v2428 = vpop.f32.mrf.mxu0
      %v2429 = vadd.f32 0.0, %v2428
      %2430 = vmatmul.bf16.gmra.mxu0 %v2400
      %v2431 = vpop.f32.mrf.mxu0
      %v2432 = vadd.f32 0.0, %v2431
      %v2433 = vpop.f32.mrf.mxu0
      %v2434 = vadd.f32 0.0, %v2433
      %2435 = vmatmul.bf16.gmra.mxu0 %v2402
      %v2436 = vpop.f32.mrf.mxu0
      %v2437 = vadd.f32 0.0, %v2436
      %v2438 = vpop.f32.mrf.mxu0
      %v2439 = vadd.f32 0.0, %v2438
      %2440 = vdwg.mxu0
      %2441 = vmatpush.bf16.msra.mxu0 %v2325
      %2442 = vmatpush.bf16.msra.mxu0 %v2324
      %2443 = vmatpush.bf16.msra.mxu0 %v2323
      %2444 = vmatpush.bf16.msra.mxu0 %v2322
      %2445 = vmatpush.bf16.msra.mxu0 %v2321
      %2446 = vmatpush.bf16.msra.mxu0 %v2320
      %2447 = vmatpush.bf16.msra.mxu0 %v2319
      %2448 = vmatpush.bf16.msra.mxu0 %v2318
      %2449 = vmatmul.bf16.gmra.mxu0 %v2397
      %v2450 = vpop.f32.mrf.mxu0
      %v2451 = vadd.f32 %v2422, %v2450
      %v2452 = vpop.f32.mrf.mxu0
      %v2453 = vadd.f32 %v2424, %v2452
      %2454 = vmatmul.bf16.gmra.mxu0 %v2399
      %v2455 = vpop.f32.mrf.mxu0
      %v2456 = vadd.f32 %v2427, %v2455
      %v2457 = vpop.f32.mrf.mxu0
      %v2458 = vadd.f32 %v2429, %v2457
      %2459 = vmatmul.bf16.gmra.mxu0 %v2401
      %v2460 = vpop.f32.mrf.mxu0
      %v2461 = vadd.f32 %v2432, %v2460
      %v2462 = vpop.f32.mrf.mxu0
      %v2463 = vadd.f32 %v2434, %v2462
      %2464 = vmatmul.bf16.gmra.mxu0 %v2403
      %v2465 = vpop.f32.mrf.mxu0
      %v2466 = vadd.f32 %v2437, %v2465
      %v2467 = vpop.f32.mrf.mxu0
      %v2468 = vadd.f32 %v2439, %v2467
      %2469 = vdwg.mxu0
      %v2470 = vadd.f32 %v2404, %v2451
      %v2471 = vadd.f32 %v2405, %v2453
      %v2472 = vadd.f32 %v2406, %v2456
      %v2473 = vadd.f32 %v2407, %v2458
      %v2474 = vadd.f32 %v2408, %v2461
      %v2475 = vadd.f32 %v2409, %v2463
      %v2476 = vadd.f32 %v2410, %v2466
      %v2477 = vadd.f32 %v2411, %v2468
      %vm2478 = vcmask 326656
      %2479 = vst.msk [vmem:[%s392] sm:$0xff] %vm2478, %v2470
      %2480 = vst.msk [vmem:[%s392 + $0x8] sm:$0xff] %vm2478, %v2471
      %2481 = vst.msk [vmem:[%s392 + $0x10] sm:$0xff] %vm2478, %v2472
      %2482 = vst.msk [vmem:[%s392 + $0x18] sm:$0xff] %vm2478, %v2473
      %2483 = vst.msk [vmem:[%s392 + $0x20] sm:$0xff] %vm2478, %v2474
      %2484 = vst.msk [vmem:[%s392 + $0x28] sm:$0xff] %vm2478, %v2475
      %2485 = vst.msk [vmem:[%s392 + $0x30] sm:$0xff] %vm2478, %v2476
      %2486 = vst.msk [vmem:[%s392 + $0x38] sm:$0xff] %vm2478, %v2477
      %p2487 = scmp.eq.s32.totalorder %s26, 1
      // Predicated region
      $region65: #{tpu_custom_call.1} parent=59 // pred_check
        %p2488 = pneg %p2487
      $region66: #{tpu_custom_call.1} parent=59 // pred_check_branch
        %2490 = sbr.rel (%p2488) target = $region68
      $region67: #{tpu_custom_call.1} parent=59 // pred_region
        %v2491 = vld [vmem:[%s392] sm:$0xff]
        %v2492 = vld [vmem:[%s392 + $0x8] sm:$0xff]
        %v2493 = vld [vmem:[%s392 + $0x10] sm:$0xff]
        %v2494 = vld [vmem:[%s392 + $0x18] sm:$0xff]
        %v2495 = vld [vmem:[%s392 + $0x20] sm:$0xff]
        %v2496 = vld [vmem:[%s392 + $0x28] sm:$0xff]
        %v2497 = vld [vmem:[%s392 + $0x30] sm:$0xff]
        %v2498 = vld [vmem:[%s392 + $0x38] sm:$0xff]
        %v2499 = vmax.f32 %v2491, 1.0
        %v2500 = vmax.f32 %v2492, 1.0
        %v2501 = vmax.f32 %v2493, 1.0
        %v2502 = vmax.f32 %v2494, 1.0
        %v2503 = vmax.f32 %v2495, 1.0
        %v2504 = vmax.f32 %v2496, 1.0
        %v2505 = vmax.f32 %v2497, 1.0
        %v2506 = vmax.f32 %v2498, 1.0
        %v2507 = vrcp.pop %v2499
        %v2508 = vmul.f32 %v2499, %v2507
        %v2509 = vsub.f32 1.0, %v2508
        %v2510 = vmul.f32 %v2507, %v2509
        %v2511 = vadd.f32 %v2507, %v2510
        %vm2512 = vweird.f32 %v2499
        %vm2513 = vweird.f32 %v2507
        %vm2514 = vmor %vm2512, %vm2513
        %v2515 = vsel %vm2514, %v2507, %v2511
        %v2516 = vand.u32 2147483647, %v2499
        %vm2517 = vcmp.eq.f32.partialorder %v2516, 8.507059e+37
        %v2518 = vand.u32 %v2499, 2147483648
        %v2519 = vor.u32 1.1754944e-38, %v2518
        %v2520 = vsel %vm2517, %v2519, %v2515
        %v2521 = vmul.f32 1.0, %v2520
        %v2522 = vrcp.pop %v2500
        %v2523 = vmul.f32 %v2500, %v2522
        %v2524 = vsub.f32 1.0, %v2523
        %v2525 = vmul.f32 %v2522, %v2524
        %v2526 = vadd.f32 %v2522, %v2525
        %vm2527 = vweird.f32 %v2500
        %vm2528 = vweird.f32 %v2522
        %vm2529 = vmor %vm2527, %vm2528
        %v2530 = vsel %vm2529, %v2522, %v2526
        %v2531 = vand.u32 2147483647, %v2500
        %vm2532 = vcmp.eq.f32.partialorder %v2531, 8.507059e+37
        %v2533 = vand.u32 %v2500, 2147483648
        %v2534 = vor.u32 1.1754944e-38, %v2533
        %v2535 = vsel %vm2532, %v2534, %v2530
        %v2536 = vmul.f32 1.0, %v2535
        %v2537 = vrcp.pop %v2501
        %v2538 = vmul.f32 %v2501, %v2537
        %v2539 = vsub.f32 1.0, %v2538
        %v2540 = vmul.f32 %v2537, %v2539
        %v2541 = vadd.f32 %v2537, %v2540
        %vm2542 = vweird.f32 %v2501
        %vm2543 = vweird.f32 %v2537
        %vm2544 = vmor %vm2542, %vm2543
        %v2545 = vsel %vm2544, %v2537, %v2541
        %v2546 = vand.u32 2147483647, %v2501
        %vm2547 = vcmp.eq.f32.partialorder %v2546, 8.507059e+37
        %v2548 = vand.u32 %v2501, 2147483648
        %v2549 = vor.u32 1.1754944e-38, %v2548
        %v2550 = vsel %vm2547, %v2549, %v2545
        %v2551 = vmul.f32 1.0, %v2550
        %v2552 = vrcp.pop %v2502
        %v2553 = vmul.f32 %v2502, %v2552
        %v2554 = vsub.f32 1.0, %v2553
        %v2555 = vmul.f32 %v2552, %v2554
        %v2556 = vadd.f32 %v2552, %v2555
        %vm2557 = vweird.f32 %v2502
        %vm2558 = vweird.f32 %v2552
        %vm2559 = vmor %vm2557, %vm2558
        %v2560 = vsel %vm2559, %v2552, %v2556
        %v2561 = vand.u32 2147483647, %v2502
        %vm2562 = vcmp.eq.f32.partialorder %v2561, 8.507059e+37
        %v2563 = vand.u32 %v2502, 2147483648
        %v2564 = vor.u32 1.1754944e-38, %v2563
        %v2565 = vsel %vm2562, %v2564, %v2560
        %v2566 = vmul.f32 1.0, %v2565
        %v2567 = vrcp.pop %v2503
        %v2568 = vmul.f32 %v2503, %v2567
        %v2569 = vsub.f32 1.0, %v2568
        %v2570 = vmul.f32 %v2567, %v2569
        %v2571 = vadd.f32 %v2567, %v2570
        %vm2572 = vweird.f32 %v2503
        %vm2573 = vweird.f32 %v2567
        %vm2574 = vmor %vm2572, %vm2573
        %v2575 = vsel %vm2574, %v2567, %v2571
        %v2576 = vand.u32 2147483647, %v2503
        %vm2577 = vcmp.eq.f32.partialorder %v2576, 8.507059e+37
        %v2578 = vand.u32 %v2503, 2147483648
        %v2579 = vor.u32 1.1754944e-38, %v2578
        %v2580 = vsel %vm2577, %v2579, %v2575
        %v2581 = vmul.f32 1.0, %v2580
        %v2582 = vrcp.pop %v2504
        %v2583 = vmul.f32 %v2504, %v2582
        %v2584 = vsub.f32 1.0, %v2583
        %v2585 = vmul.f32 %v2582, %v2584
        %v2586 = vadd.f32 %v2582, %v2585
        %vm2587 = vweird.f32 %v2504
        %vm2588 = vweird.f32 %v2582
        %vm2589 = vmor %vm2587, %vm2588
        %v2590 = vsel %vm2589, %v2582, %v2586
        %v2591 = vand.u32 2147483647, %v2504
        %vm2592 = vcmp.eq.f32.partialorder %v2591, 8.507059e+37
        %v2593 = vand.u32 %v2504, 2147483648
        %v2594 = vor.u32 1.1754944e-38, %v2593
        %v2595 = vsel %vm2592, %v2594, %v2590
        %v2596 = vmul.f32 1.0, %v2595
        %v2597 = vrcp.pop %v2505
        %v2598 = vmul.f32 %v2505, %v2597
        %v2599 = vsub.f32 1.0, %v2598
        %v2600 = vmul.f32 %v2597, %v2599
        %v2601 = vadd.f32 %v2597, %v2600
        %vm2602 = vweird.f32 %v2505
        %vm2603 = vweird.f32 %v2597
        %vm2604 = vmor %vm2602, %vm2603
        %v2605 = vsel %vm2604, %v2597, %v2601
        %v2606 = vand.u32 2147483647, %v2505
        %vm2607 = vcmp.eq.f32.partialorder %v2606, 8.507059e+37
        %v2608 = vand.u32 %v2505, 2147483648
        %v2609 = vor.u32 1.1754944e-38, %v2608
        %v2610 = vsel %vm2607, %v2609, %v2605
        %v2611 = vmul.f32 1.0, %v2610
        %v2612 = vrcp.pop %v2506
        %v2613 = vmul.f32 %v2506, %v2612
        %v2614 = vsub.f32 1.0, %v2613
        %v2615 = vmul.f32 %v2612, %v2614
        %v2616 = vadd.f32 %v2612, %v2615
        %vm2617 = vweird.f32 %v2506
        %vm2618 = vweird.f32 %v2612
        %vm2619 = vmor %vm2617, %vm2618
        %v2620 = vsel %vm2619, %v2612, %v2616
        %v2621 = vand.u32 2147483647, %v2506
        %vm2622 = vcmp.eq.f32.partialorder %v2621, 8.507059e+37
        %v2623 = vand.u32 %v2506, 2147483648
        %v2624 = vor.u32 1.1754944e-38, %v2623
        %v2625 = vsel %vm2622, %v2624, %v2620
        %v2626 = vmul.f32 1.0, %v2625
        %2628 = vset.pattern.permute.xlu0 35
        %2629 = vperm.xlu0 %2628, %v2521
        %v2630 = vpop.permute.xlu0 %2629
        %2633 = vset.pattern.permute.xlu0 35
        %2634 = vperm.xlu0 %2633, %v2536
        %v2635 = vpop.permute.xlu0 %2634
        %2638 = vset.pattern.permute.xlu0 35
        %2639 = vperm.xlu0 %2638, %v2551
        %v2640 = vpop.permute.xlu0 %2639
        %2643 = vset.pattern.permute.xlu0 35
        %2644 = vperm.xlu0 %2643, %v2566
        %v2645 = vpop.permute.xlu0 %2644
        %2648 = vset.pattern.permute.xlu0 35
        %2649 = vperm.xlu0 %2648, %v2581
        %v2650 = vpop.permute.xlu0 %2649
        %2653 = vset.pattern.permute.xlu0 35
        %2654 = vperm.xlu0 %2653, %v2596
        %v2655 = vpop.permute.xlu0 %2654
        %2658 = vset.pattern.permute.xlu0 35
        %2659 = vperm.xlu0 %2658, %v2611
        %v2660 = vpop.permute.xlu0 %2659
        %2663 = vset.pattern.permute.xlu0 35
        %2664 = vperm.xlu0 %2663, %v2626
        %v2665 = vpop.permute.xlu0 %2664
        %v2667 = vmul.f32 %v2491, %v2630
        %v2668 = vmul.f32 %v2492, %v2635
        %v2669 = vmul.f32 %v2493, %v2640
        %v2670 = vmul.f32 %v2494, %v2645
        %v2671 = vmul.f32 %v2495, %v2650
        %v2672 = vmul.f32 %v2496, %v2655
        %v2673 = vmul.f32 %v2497, %v2660
        %v2674 = vmul.f32 %v2498, %v2665
        %2675 = vst.msk [vmem:[%s392] sm:$0xff] %vm2478, %v2667
        %2676 = vst.msk [vmem:[%s392 + $0x8] sm:$0xff] %vm2478, %v2668
        %2677 = vst.msk [vmem:[%s392 + $0x10] sm:$0xff] %vm2478, %v2669
        %2678 = vst.msk [vmem:[%s392 + $0x18] sm:$0xff] %vm2478, %v2670
        %2679 = vst.msk [vmem:[%s392 + $0x20] sm:$0xff] %vm2478, %v2671
        %2680 = vst.msk [vmem:[%s392 + $0x28] sm:$0xff] %vm2478, %v2672
        %2681 = vst.msk [vmem:[%s392 + $0x30] sm:$0xff] %vm2478, %v2673
        %2682 = vst.msk [vmem:[%s392 + $0x38] sm:$0xff] %vm2478, %v2674
      $region68: #{tpu_custom_call.1} parent=59 // pred_fallthru
        _
      %s2683 = smul.u32 8, %s25
      %p2684 = scmp.lt.s32.totalorder %s2683, 15
      %s2685 = scalar_select %p2684, %s2683, 15
      %s2686 = smul.addr %s2685, 8
      %s2687 = scalar_lea.vmem %s10, %s2686
      // Predicated region
      $region69: #{tpu_custom_call.1} parent=59 // pred_check
        %p2688 = pneg %p271
      $region70: #{tpu_custom_call.1} parent=59 // pred_check_branch
        %2690 = sbr.rel (%p2688) target = $region72
      $region71: #{tpu_custom_call.1} parent=59 // pred_region
        %s2691 = smul.u32 8, %s25
      $region72: #{tpu_custom_call.1} parent=59 // pred_fallthru
        _
    $region60: #{tpu_custom_call.1} parent=5 // pred_fallthru
      _
    %p2692 = scmp.le.s32.totalorder 2, %s16
    // Predicated region
    $region73: #{tpu_custom_call.1} parent=5 // pred_check
      %p2693 = pneg %p2692
    $region74: #{tpu_custom_call.1} parent=5 // pred_check_branch
      %2695 = sbr.rel (%p2693) target = $region76
    $region75: #{tpu_custom_call.1} parent=5 // pred_region
      %s2696 = ssub.s32 %s16, 2
      // Predicated region
      $region77: #{tpu_custom_call.1} parent=75 // pred_check
        %p2697 = pneg %p277
      $region78: #{tpu_custom_call.1} parent=75 // pred_check_branch
        %2699 = sbr.rel (%p2697) target = $region80
      $region79: #{tpu_custom_call.1} parent=75 // pred_region
        %s2700 = smul.u32 8, %s27
        %p2701 = scmp.lt.s32.totalorder %s2700, 15
        %s2702 = scalar_select %p2701, %s2700, 15
        %s2703 = smul.addr %s2702, 8
        %s2704 = scalar_lea.vmem %s10, %s2703
      $region80: #{tpu_custom_call.1} parent=75 // pred_fallthru
        _
    $region76: #{tpu_custom_call.1} parent=5 // pred_fallthru
      _
  $region6: #{tpu_custom_call.1} parent=0 // loop_footer
    %s20 = sadd.s32 1, %s16
  $region7: #{tpu_custom_call.1} parent=0 // loop_footer_branch
    %15 = sbr.rel target = $region3
  $region8: #{tpu_custom_call.1} parent=0 // loop_exit
    _

</llo_original>
